<compile_context>
chip_gen: v5e
topology: v5e:2x2
jax: 0.10.0
libtpu: 0.0.40
codegen_flags: <defaults>
</compile_context>

<pallas_src>
import functools
import math

import jax
import jax.numpy as jnp
from jax.experimental import pallas as pl
from jax.experimental.pallas import tpu as pltpu


def _round_up(x, m):
    return (x + m - 1) // m * m


def _vmem_budget_bytes():
    """Conservative per-TensorCore VMEM budget for the per-step working set."""
    try:
        cap = pltpu.get_tpu_info().vmem_capacity_bytes
    except Exception:
        cap = 64 << 20                     # v7x per-TC VMEM (smallest generation)
    return max(16 << 20, min(cap // 3, 40 << 20))


def _pick_b_tile(B, T, hidden, vocab, requested=None):
    """Batch tile: multiple of 128 (lane-dense slices/stores), VMEM-budget
    capped, and >= 2 grid steps when the batch allows (v7x megacore)."""
    B128 = _round_up(max(int(B), 1), 128)
    # Rough per-sample working-set bytes: double-buffered ids row (8-sublane
    # pad), bf16 one-hot, f32 accumulator + bf16 activations (~2 live layers).
    per_sample = T * (2 * 8 * 4 + 2 * vocab + 2 * (4 + 2) * hidden) + 64
    cap = max(128, _vmem_budget_bytes() // per_sample // 128 * 128)
    if requested is None:
        bt = min(512, B128, cap)
    else:
        bt = min(_round_up(int(requested), 128), B128, cap)
    bt = max(bt, 128)
    if _round_up(B, bt) // bt < 2 and B128 >= 256:
        bt = max(128, _round_up(B128 // 2, 128))
    return bt


def _make_kernel(kernel_size, dilations, seq_len, b_tile, vocab):
    """One grid step = one batch block of `b_tile` samples; layers fully unrolled.

    Activation layout is channel-major (C, L*b_tile), column index = t*b_tile+b,
    so every dilation tap is a 128-aligned lane slice and every store is
    lane-dense.
    """
    K = kernel_size
    Bt = b_tile
    R = seq_len * Bt

    def kernel(ids_ref, *refs):
        out_ref = refs[-1]
        params = refs[:-1]             # (K,C_out,C_in)/(C_out,1) pairs, then final

        # Layer-0 input: bf16 one-hot (V, R).  The embedding is already folded
        # into the layer-0 weights in the wrapper, so there is no separate
        # embedding matmul.  (Token ids >= vocab give an all-zero column, i.e.
        # a zero embedding, instead of an OOB error.)
        ids = ids_ref[...][0]                                   # (1, R) int32
        iota_v = jax.lax.broadcasted_iota(jnp.int32, (vocab, R), 0)
        x = (iota_v == ids).astype(jnp.bfloat16)                # (V, R)

        L = seq_len
        idx = 0
        for d in dilations:
            w = params[idx][...]           # (K, C_out, C_in) bf16
            bias = params[idx + 1][...]    # (C_out, 1)       f32
            idx += 2
            L_out = L - d * (K - 1)
            N = L_out * Bt
            # K accumulated MXU matmuls (one per tap); no lane-axis concat.
            acc = jnp.dot(w[0], x[:, :N], preferred_element_type=jnp.float32)
            for j in range(1, K):
                s = j * d * Bt             # multiple of 128 -> aligned lane slice
                acc = acc + jnp.dot(w[j], x[:, s:s + N],
                                    preferred_element_type=jnp.float32)
            # f32 bias + ReLU epilogue; single bf16 cast for the next layer.
            x = jnp.maximum(acc + bias, 0.0).astype(jnp.bfloat16)
            L = L_out

        # Final 1x1 conv (no ReLU); L == 1 here so x is (hidden, b_tile).
        wf = params[idx][...]              # (output_size, hidden) bf16
        bf = params[idx + 1][...]          # (output_size, 1)      f32
        y = jnp.dot(wf, x, preferred_element_type=jnp.float32) + bf
        out_ref[...] = y.astype(out_ref.dtype)   # (output_size, b_tile) lane-dense

    return kernel


def cnn_forward_pallas(token_ids, emb_table, conv_params, final_params, *,
                       max_len, kernel_size, b_tile=None):
    """token_ids: (B, max_len) int. Returns (B, output_size) float32.

    b_tile=None derives the batch tile from the VMEM budget (multiple of 128,
    <=512; smaller automatically on v7x's 64 MiB/TC).
    """
    n = int(math.log2(max_len))
    dilations = [2 ** i for i in range(n)]
    K = kernel_size
    width = sum(d * (K - 1) for d in dilations) - max_len + 1
    assert width >= 0, "module requires sum(dilation*(K-1)) >= max_len - 1"

    B, _ = token_ids.shape
    V, _E = emb_table.shape
    T = max_len + width                                    # padded sequence length
    assert T - sum(d * (K - 1) for d in dilations) == 1    # length collapses to 1
    hidden = conv_params[0][0].shape[0]
    wf, bf = final_params
    output_size = wf.shape[0]

    bt = _pick_b_tile(B, T, hidden, V, requested=b_tile)
    B_pad = _round_up(B, bt)
    num_blocks = B_pad // bt
    R = T * bt

    # Token ids: left-pad time with 0 (== F.pad), pad batch, then one lane-dense
    # int32 row per block with column index = t*b_tile + b.
    padded = jnp.pad(token_ids.astype(jnp.int32), ((0, B_pad - B), (width, 0)))
    ids = jnp.transpose(padded.reshape(num_blocks, bt, T), (0, 2, 1))
    ids = ids.reshape(num_blocks, 1, R)

    # Layer 0: fold the embedding into the per-tap weights -> (K, C_out, V).
    w0, b0 = conv_params[0]
    w0_fold = jnp.einsum("oek,ve->kov", w0.astype(jnp.float32),
                         emb_table.astype(jnp.float32)).astype(jnp.bfloat16)

    param_inputs = [w0_fold, b0.reshape(-1, 1).astype(jnp.float32)]
    for (w, bias) in conv_params[1:]:
        param_inputs.append(jnp.transpose(w, (2, 0, 1)).astype(jnp.bfloat16))
        param_inputs.append(bias.reshape(-1, 1).astype(jnp.float32))
    param_inputs.append(wf[:, :, 0].astype(jnp.bfloat16))          # (out, hidden)
    param_inputs.append(bf.reshape(-1, 1).astype(jnp.float32))     # (out, 1)

    in_specs = [pl.BlockSpec((1, 1, R), lambda i: (i, 0, 0))]
    for p in param_inputs:
        zeros = (0,) * p.ndim
        in_specs.append(pl.BlockSpec(p.shape, lambda i, z=zeros: z))
    # TODO(synk): grid-invariant parameter blocks are still double-buffered;
    # single-buffering them is a negligible win at hidden=32 so it is skipped.

    # Advisory cost estimate for XLA's scheduler.
    flops = 0
    contr, L = V, T
    for (w, _), d in zip(conv_params, dilations):
        c_out = int(w.shape[0])
        L -= d * (K - 1)
        flops += 2 * K * c_out * contr * L
        contr = c_out
    flops += 2 * output_size * contr
    flops *= B_pad
    bytes_accessed = int(ids.size * 4 + B_pad * output_size * 4
                         + sum(int(p.size) * p.dtype.itemsize for p in param_inputs))

    # Per-step working-set estimate -> explicit scoped-VMEM limit (headroom on
    # v7x's 64 MiB/TC, well under v5e/v6e's 128 MiB physical).
    est = (2 * 8 * R * 4 + V * R * 2 + 2 * hidden * R * (4 + 2)
           + 2 * output_size * bt * 4
           + 2 * sum(int(p.size) * p.dtype.itemsize for p in param_inputs))
    vmem_limit = int(min(48 << 20, max(32 << 20, 2 * est)))

    # TODO(synk): nn.Dropout / add_noise are training-only; eval forward omits them.
    out = pl.pallas_call(
        _make_kernel(K, dilations, T, bt, V),
        out_shape=jax.ShapeDtypeStruct((output_size, B_pad), jnp.float32),
        grid=(num_blocks,),
        in_specs=in_specs,
        out_specs=pl.BlockSpec((output_size, bt), lambda i: (0, i)),
        compiler_params=pltpu.CompilerParams(
            dimension_semantics=("parallel",),
            vmem_limit_bytes=vmem_limit),
        cost_estimate=pl.CostEstimate(flops=int(flops), transcendentals=0,
                                      bytes_accessed=bytes_accessed),
    )(ids, *param_inputs)
    return out[:, :B].T                                    # (B, output_size)


def cnn_forward_reference(token_ids, emb_table, conv_params, final_params, *,
                          max_len, kernel_size):
    """Pure-JAX f32 reference matching PyTorch NCW conv semantics."""
    n = int(math.log2(max_len))
    dilations = [2 ** i for i in range(n)]
    width = sum(d * (kernel_size - 1) for d in dilations) - max_len + 1
    padded = jnp.pad(token_ids, ((0, 0), (width, 0)), constant_values=0)
    x = jnp.transpose(emb_table[padded], (0, 2, 1))        # (B, E, T) == NCW
    for (w, b), d in zip(conv_params, dilations):
        x = jax.lax.conv_general_dilated(
            x, w, window_strides=(1,), padding="VALID", rhs_dilation=(d,),
            dimension_numbers=("NCH", "OIH", "NCH"))
        x = jnp.maximum(x + b[None, :, None], 0.0)
    wf, bf = final_params
    x = jax.lax.conv_general_dilated(
        x, wf, window_strides=(1,), padding="VALID",
        dimension_numbers=("NCH", "OIH", "NCH")) + bf[None, :, None]
    return x[..., 0]                                       # squeeze(-1)


if __name__ == "__main__":
    # Small config consistent with the module's __init__ (2 batch blocks of 128).
    B = 256
    vocab_size = 16
    input_size = 4        # embedding dim (= conv c_in of first layer)
    hidden_size = 32
    output_size = 8
    max_len = 8           # n = log2(8) = 3 dilated conv layers
    kernel_size = 3       # width = (1+2+4)*2 - 8 + 1 = 7 -> padded length T = 15

    key = jax.random.PRNGKey(0)
    keys = jax.random.split(key, 16)

    # Deterministic synthetic parameters (stand-in for `pretrained` / conv init).
    emb_table = jax.random.normal(keys[0], (vocab_size, input_size), jnp.float32)

    n_layers = int(math.log2(max_len))
    conv_params = []
    c_in = input_size
    for i in range(n_layers):
        w = 0.1 * jax.random.normal(
            keys[1 + 2 * i], (hidden_size, c_in, kernel_size), jnp.float32)
        b = 0.1 * jax.random.normal(keys[2 + 2 * i], (hidden_size,), jnp.float32)
        conv_params.append((w, b))
        c_in = hidden_size
    wf = 0.1 * jax.random.normal(keys[10], (output_size, hidden_size, 1), jnp.float32)
    bf = 0.1 * jax.random.normal(keys[11], (output_size,), jnp.float32)
    final_params = (wf, bf)

    token_ids = jax.random.randint(keys[12], (B, max_len), 0, vocab_size,
                                   dtype=jnp.int32)

    run = functools.partial(cnn_forward_pallas, max_len=max_len,
                            kernel_size=kernel_size)   # b_tile auto-derived
    out = jax.block_until_ready(run(token_ids, emb_table, conv_params,
                                    final_params))
    assert out.shape == (B, output_size), out.shape

    ref = cnn_forward_reference(token_ids, emb_table, conv_params, final_params,
                                max_len=max_len, kernel_size=kernel_size)
    # bf16 MXU inputs with f32 accumulation -> small numerical delta vs f32 ref.
    err = float(jnp.max(jnp.abs(out - ref)))
    assert err < 5e-2, f"max abs err {err}"

    print("KERNEL_OK")
</pallas_src>

<mosaic_0001>
module attributes {stable_mosaic.version = 11 : i64} {
  func.func @kernel(%arg0: i32, %arg1: memref<1x1x1920xi32, #tpu.memory_space<vmem>>, %arg2: memref<3x32x16xbf16, #tpu.memory_space<vmem>>, %arg3: memref<32x1xf32, #tpu.memory_space<vmem>>, %arg4: memref<3x32x32xbf16, #tpu.memory_space<vmem>>, %arg5: memref<32x1xf32, #tpu.memory_space<vmem>>, %arg6: memref<3x32x32xbf16, #tpu.memory_space<vmem>>, %arg7: memref<32x1xf32, #tpu.memory_space<vmem>>, %arg8: memref<8x32xbf16, #tpu.memory_space<vmem>>, %arg9: memref<8x1xf32, #tpu.memory_space<vmem>>, %arg10: memref<8x128xf32, #tpu.memory_space<vmem>>) attributes {dimension_semantics = [#tpu.dimension_semantics<parallel>], iteration_bounds = array<i64: 2>, scalar_prefetch = 0 : i64, scratch_operands = 0 : i64, tpu.core_type = #tpu.core_type<tc>, window_params = [{transform_indices = @transform_0, window_bounds = array<i64: 1, 1, 1920>}, {pipeline_mode = #tpu.pipeline_mode<synchronous>, transform_indices = @transform_1, window_bounds = array<i64: 3, 32, 16>}, {pipeline_mode = #tpu.pipeline_mode<synchronous>, transform_indices = @transform_2, window_bounds = array<i64: 32, 1>}, {pipeline_mode = #tpu.pipeline_mode<synchronous>, transform_indices = @transform_3, window_bounds = array<i64: 3, 32, 32>}, {pipeline_mode = #tpu.pipeline_mode<synchronous>, transform_indices = @transform_4, window_bounds = array<i64: 32, 1>}, {pipeline_mode = #tpu.pipeline_mode<synchronous>, transform_indices = @transform_5, window_bounds = array<i64: 3, 32, 32>}, {pipeline_mode = #tpu.pipeline_mode<synchronous>, transform_indices = @transform_6, window_bounds = array<i64: 32, 1>}, {pipeline_mode = #tpu.pipeline_mode<synchronous>, transform_indices = @transform_7, window_bounds = array<i64: 8, 32>}, {pipeline_mode = #tpu.pipeline_mode<synchronous>, transform_indices = @transform_8, window_bounds = array<i64: 8, 1>}, {transform_indices = @transform_9, window_bounds = array<i64: 8, 128>}]} {
    %c0 = arith.constant 0 : index
    %c0_0 = arith.constant 0 : index
    %c0_1 = arith.constant 0 : index
    %0 = vector.load %arg1[%c0, %c0_0, %c0_1] : memref<1x1x1920xi32, #tpu.memory_space<vmem>>, vector<1x1x1920xi32>
    %1 = vector.shape_cast %0 : vector<1x1x1920xi32> to vector<1x1920xi32>
    %2 = tpu.iota {dimensions = array<i32: 0>} : vector<16x1920xi32>
    %3 = vector.broadcast %1 : vector<1x1920xi32> to vector<16x1920xi32>
    %4 = arith.cmpi eq, %2, %3 : vector<16x1920xi32>
    %5 = arith.extui %4 : vector<16x1920xi1> to vector<16x1920xi32>
    %6 = arith.sitofp %5 : vector<16x1920xi32> to vector<16x1920xf32>
    %7 = arith.truncf %6 : vector<16x1920xf32> to vector<16x1920xbf16>
    %c0_2 = arith.constant 0 : index
    %c0_3 = arith.constant 0 : index
    %c0_4 = arith.constant 0 : index
    %8 = vector.load %arg2[%c0_2, %c0_3, %c0_4] : memref<3x32x16xbf16, #tpu.memory_space<vmem>>, vector<3x32x16xbf16>
    %c0_5 = arith.constant 0 : index
    %c0_6 = arith.constant 0 : index
    %9 = vector.load %arg3[%c0_5, %c0_6] : memref<32x1xf32, #tpu.memory_space<vmem>>, vector<32x1xf32>
    %10 = vector.extract_strided_slice %8 {offsets = [0, 0, 0], sizes = [1, 32, 16], strides = [1, 1, 1]} : vector<3x32x16xbf16> to vector<1x32x16xbf16>
    %11 = vector.shape_cast %10 : vector<1x32x16xbf16> to vector<32x16xbf16>
    %12 = vector.extract_strided_slice %7 {offsets = [0, 0], sizes = [16, 1664], strides = [1, 1]} : vector<16x1920xbf16> to vector<16x1664xbf16>
    %cst = arith.constant dense<0.000000e+00> : vector<32x1664xf32>
    %13 = tpu.matmul %11, %12, %cst {dimension_numbers = #tpu.dot_dimension_numbers<[1], [0], [0], [1], [0, 0, 1, 1], [], []>} : vector<32x16xbf16>, vector<16x1664xbf16>, vector<32x1664xf32> -> vector<32x1664xf32>
    %14 = vector.extract_strided_slice %8 {offsets = [1, 0, 0], sizes = [1, 32, 16], strides = [1, 1, 1]} : vector<3x32x16xbf16> to vector<1x32x16xbf16>
    %15 = vector.shape_cast %14 : vector<1x32x16xbf16> to vector<32x16xbf16>
    %16 = vector.extract_strided_slice %7 {offsets = [0, 128], sizes = [16, 1664], strides = [1, 1]} : vector<16x1920xbf16> to vector<16x1664xbf16>
    %cst_7 = arith.constant dense<0.000000e+00> : vector<32x1664xf32>
    %17 = tpu.matmul %15, %16, %cst_7 {dimension_numbers = #tpu.dot_dimension_numbers<[1], [0], [0], [1], [0, 0, 1, 1], [], []>} : vector<32x16xbf16>, vector<16x1664xbf16>, vector<32x1664xf32> -> vector<32x1664xf32>
    %18 = arith.addf %13, %17 : vector<32x1664xf32>
    %19 = vector.extract_strided_slice %8 {offsets = [2, 0, 0], sizes = [1, 32, 16], strides = [1, 1, 1]} : vector<3x32x16xbf16> to vector<1x32x16xbf16>
    %20 = vector.shape_cast %19 : vector<1x32x16xbf16> to vector<32x16xbf16>
    %21 = vector.extract_strided_slice %7 {offsets = [0, 256], sizes = [16, 1664], strides = [1, 1]} : vector<16x1920xbf16> to vector<16x1664xbf16>
    %cst_8 = arith.constant dense<0.000000e+00> : vector<32x1664xf32>
    %22 = tpu.matmul %20, %21, %cst_8 {dimension_numbers = #tpu.dot_dimension_numbers<[1], [0], [0], [1], [0, 0, 1, 1], [], []>} : vector<32x16xbf16>, vector<16x1664xbf16>, vector<32x1664xf32> -> vector<32x1664xf32>
    %23 = arith.addf %18, %22 : vector<32x1664xf32>
    %24 = vector.broadcast %9 : vector<32x1xf32> to vector<32x1664xf32>
    %25 = arith.addf %23, %24 : vector<32x1664xf32>
    %cst_9 = arith.constant 0.000000e+00 : f32
    %26 = vector.broadcast %cst_9 : f32 to vector<32x1664xf32>
    %27 = arith.maximumf %25, %26 : vector<32x1664xf32>
    %28 = arith.truncf %27 : vector<32x1664xf32> to vector<32x1664xbf16>
    %c0_10 = arith.constant 0 : index
    %c0_11 = arith.constant 0 : index
    %c0_12 = arith.constant 0 : index
    %29 = vector.load %arg4[%c0_10, %c0_11, %c0_12] : memref<3x32x32xbf16, #tpu.memory_space<vmem>>, vector<3x32x32xbf16>
    %c0_13 = arith.constant 0 : index
    %c0_14 = arith.constant 0 : index
    %30 = vector.load %arg5[%c0_13, %c0_14] : memref<32x1xf32, #tpu.memory_space<vmem>>, vector<32x1xf32>
    %31 = vector.extract_strided_slice %29 {offsets = [0, 0, 0], sizes = [1, 32, 32], strides = [1, 1, 1]} : vector<3x32x32xbf16> to vector<1x32x32xbf16>
    %32 = vector.shape_cast %31 : vector<1x32x32xbf16> to vector<32x32xbf16>
    %33 = vector.extract_strided_slice %28 {offsets = [0, 0], sizes = [32, 1152], strides = [1, 1]} : vector<32x1664xbf16> to vector<32x1152xbf16>
    %cst_15 = arith.constant dense<0.000000e+00> : vector<32x1152xf32>
    %34 = tpu.matmul %32, %33, %cst_15 {dimension_numbers = #tpu.dot_dimension_numbers<[1], [0], [0], [1], [0, 0, 1, 1], [], []>} : vector<32x32xbf16>, vector<32x1152xbf16>, vector<32x1152xf32> -> vector<32x1152xf32>
    %35 = vector.extract_strided_slice %29 {offsets = [1, 0, 0], sizes = [1, 32, 32], strides = [1, 1, 1]} : vector<3x32x32xbf16> to vector<1x32x32xbf16>
    %36 = vector.shape_cast %35 : vector<1x32x32xbf16> to vector<32x32xbf16>
    %37 = vector.extract_strided_slice %28 {offsets = [0, 256], sizes = [32, 1152], strides = [1, 1]} : vector<32x1664xbf16> to vector<32x1152xbf16>
    %cst_16 = arith.constant dense<0.000000e+00> : vector<32x1152xf32>
    %38 = tpu.matmul %36, %37, %cst_16 {dimension_numbers = #tpu.dot_dimension_numbers<[1], [0], [0], [1], [0, 0, 1, 1], [], []>} : vector<32x32xbf16>, vector<32x1152xbf16>, vector<32x1152xf32> -> vector<32x1152xf32>
    %39 = arith.addf %34, %38 : vector<32x1152xf32>
    %40 = vector.extract_strided_slice %29 {offsets = [2, 0, 0], sizes = [1, 32, 32], strides = [1, 1, 1]} : vector<3x32x32xbf16> to vector<1x32x32xbf16>
    %41 = vector.shape_cast %40 : vector<1x32x32xbf16> to vector<32x32xbf16>
    %42 = vector.extract_strided_slice %28 {offsets = [0, 512], sizes = [32, 1152], strides = [1, 1]} : vector<32x1664xbf16> to vector<32x1152xbf16>
    %cst_17 = arith.constant dense<0.000000e+00> : vector<32x1152xf32>
    %43 = tpu.matmul %41, %42, %cst_17 {dimension_numbers = #tpu.dot_dimension_numbers<[1], [0], [0], [1], [0, 0, 1, 1], [], []>} : vector<32x32xbf16>, vector<32x1152xbf16>, vector<32x1152xf32> -> vector<32x1152xf32>
    %44 = arith.addf %39, %43 : vector<32x1152xf32>
    %45 = vector.broadcast %30 : vector<32x1xf32> to vector<32x1152xf32>
    %46 = arith.addf %44, %45 : vector<32x1152xf32>
    %cst_18 = arith.constant 0.000000e+00 : f32
    %47 = vector.broadcast %cst_18 : f32 to vector<32x1152xf32>
    %48 = arith.maximumf %46, %47 : vector<32x1152xf32>
    %49 = arith.truncf %48 : vector<32x1152xf32> to vector<32x1152xbf16>
    %c0_19 = arith.constant 0 : index
    %c0_20 = arith.constant 0 : index
    %c0_21 = arith.constant 0 : index
    %50 = vector.load %arg6[%c0_19, %c0_20, %c0_21] : memref<3x32x32xbf16, #tpu.memory_space<vmem>>, vector<3x32x32xbf16>
    %c0_22 = arith.constant 0 : index
    %c0_23 = arith.constant 0 : index
    %51 = vector.load %arg7[%c0_22, %c0_23] : memref<32x1xf32, #tpu.memory_space<vmem>>, vector<32x1xf32>
    %52 = vector.extract_strided_slice %50 {offsets = [0, 0, 0], sizes = [1, 32, 32], strides = [1, 1, 1]} : vector<3x32x32xbf16> to vector<1x32x32xbf16>
    %53 = vector.shape_cast %52 : vector<1x32x32xbf16> to vector<32x32xbf16>
    %54 = vector.extract_strided_slice %49 {offsets = [0, 0], sizes = [32, 128], strides = [1, 1]} : vector<32x1152xbf16> to vector<32x128xbf16>
    %cst_24 = arith.constant dense<0.000000e+00> : vector<32x128xf32>
    %55 = tpu.matmul %53, %54, %cst_24 {dimension_numbers = #tpu.dot_dimension_numbers<[1], [0], [0], [1], [0, 0, 1, 1], [], []>} : vector<32x32xbf16>, vector<32x128xbf16>, vector<32x128xf32> -> vector<32x128xf32>
    %56 = vector.extract_strided_slice %50 {offsets = [1, 0, 0], sizes = [1, 32, 32], strides = [1, 1, 1]} : vector<3x32x32xbf16> to vector<1x32x32xbf16>
    %57 = vector.shape_cast %56 : vector<1x32x32xbf16> to vector<32x32xbf16>
    %58 = vector.extract_strided_slice %49 {offsets = [0, 512], sizes = [32, 128], strides = [1, 1]} : vector<32x1152xbf16> to vector<32x128xbf16>
    %cst_25 = arith.constant dense<0.000000e+00> : vector<32x128xf32>
    %59 = tpu.matmul %57, %58, %cst_25 {dimension_numbers = #tpu.dot_dimension_numbers<[1], [0], [0], [1], [0, 0, 1, 1], [], []>} : vector<32x32xbf16>, vector<32x128xbf16>, vector<32x128xf32> -> vector<32x128xf32>
    %60 = arith.addf %55, %59 : vector<32x128xf32>
    %61 = vector.extract_strided_slice %50 {offsets = [2, 0, 0], sizes = [1, 32, 32], strides = [1, 1, 1]} : vector<3x32x32xbf16> to vector<1x32x32xbf16>
    %62 = vector.shape_cast %61 : vector<1x32x32xbf16> to vector<32x32xbf16>
    %63 = vector.extract_strided_slice %49 {offsets = [0, 1024], sizes = [32, 128], strides = [1, 1]} : vector<32x1152xbf16> to vector<32x128xbf16>
    %cst_26 = arith.constant dense<0.000000e+00> : vector<32x128xf32>
    %64 = tpu.matmul %62, %63, %cst_26 {dimension_numbers = #tpu.dot_dimension_numbers<[1], [0], [0], [1], [0, 0, 1, 1], [], []>} : vector<32x32xbf16>, vector<32x128xbf16>, vector<32x128xf32> -> vector<32x128xf32>
    %65 = arith.addf %60, %64 : vector<32x128xf32>
    %66 = vector.broadcast %51 : vector<32x1xf32> to vector<32x128xf32>
    %67 = arith.addf %65, %66 : vector<32x128xf32>
    %cst_27 = arith.constant 0.000000e+00 : f32
    %68 = vector.broadcast %cst_27 : f32 to vector<32x128xf32>
    %69 = arith.maximumf %67, %68 : vector<32x128xf32>
    %70 = arith.truncf %69 : vector<32x128xf32> to vector<32x128xbf16>
    %c0_28 = arith.constant 0 : index
    %c0_29 = arith.constant 0 : index
    %71 = vector.load %arg8[%c0_28, %c0_29] : memref<8x32xbf16, #tpu.memory_space<vmem>>, vector<8x32xbf16>
    %c0_30 = arith.constant 0 : index
    %c0_31 = arith.constant 0 : index
    %72 = vector.load %arg9[%c0_30, %c0_31] : memref<8x1xf32, #tpu.memory_space<vmem>>, vector<8x1xf32>
    %cst_32 = arith.constant dense<0.000000e+00> : vector<8x128xf32>
    %73 = tpu.matmul %71, %70, %cst_32 {dimension_numbers = #tpu.dot_dimension_numbers<[1], [0], [0], [1], [0, 0, 1, 1], [], []>} : vector<8x32xbf16>, vector<32x128xbf16>, vector<8x128xf32> -> vector<8x128xf32>
    %74 = vector.broadcast %72 : vector<8x1xf32> to vector<8x128xf32>
    %75 = arith.addf %73, %74 : vector<8x128xf32>
    %c0_33 = arith.constant 0 : index
    %c0_34 = arith.constant 0 : index
    %76 = vector.load %arg10[%c0_33, %c0_34] : memref<8x128xf32, #tpu.memory_space<vmem>>, vector<8x128xf32>
    tpu.vector_store %arg10[%c0_33, %c0_34], %75 {strides = array<i32>} : memref<8x128xf32, #tpu.memory_space<vmem>>, vector<8x128xf32>,
    return
  }
  func.func @transform_0(%arg0: i32) -> (i32, i32, i32) {
    %c0_i32 = arith.constant 0 : i32
    %c0_i32_0 = arith.constant 0 : i32
    %c0_i32_1 = arith.constant 0 : i32
    return %arg0, %c0_i32, %c0_i32_0 : i32, i32, i32
  }
  func.func @transform_1(%arg0: i32) -> (i32, i32, i32) {
    %c0_i32 = arith.constant 0 : i32
    %c0_i32_0 = arith.constant 0 : i32
    %c0_i32_1 = arith.constant 0 : i32
    %c0_i32_2 = arith.constant 0 : i32
    return %c0_i32, %c0_i32_0, %c0_i32_1 : i32, i32, i32
  }
  func.func @transform_2(%arg0: i32) -> (i32, i32) {
    %c0_i32 = arith.constant 0 : i32
    %c0_i32_0 = arith.constant 0 : i32
    %c0_i32_1 = arith.constant 0 : i32
    return %c0_i32, %c0_i32_0 : i32, i32
  }
  func.func @transform_3(%arg0: i32) -> (i32, i32, i32) {
    %c0_i32 = arith.constant 0 : i32
    %c0_i32_0 = arith.constant 0 : i32
    %c0_i32_1 = arith.constant 0 : i32
    %c0_i32_2 = arith.constant 0 : i32
    return %c0_i32, %c0_i32_0, %c0_i32_1 : i32, i32, i32
  }
  func.func @transform_4(%arg0: i32) -> (i32, i32) {
    %c0_i32 = arith.constant 0 : i32
    %c0_i32_0 = arith.constant 0 : i32
    %c0_i32_1 = arith.constant 0 : i32
    return %c0_i32, %c0_i32_0 : i32, i32
  }
  func.func @transform_5(%arg0: i32) -> (i32, i32, i32) {
    %c0_i32 = arith.constant 0 : i32
    %c0_i32_0 = arith.constant 0 : i32
    %c0_i32_1 = arith.constant 0 : i32
    %c0_i32_2 = arith.constant 0 : i32
    return %c0_i32, %c0_i32_0, %c0_i32_1 : i32, i32, i32
  }
  func.func @transform_6(%arg0: i32) -> (i32, i32) {
    %c0_i32 = arith.constant 0 : i32
    %c0_i32_0 = arith.constant 0 : i32
    %c0_i32_1 = arith.constant 0 : i32
    return %c0_i32, %c0_i32_0 : i32, i32
  }
  func.func @transform_7(%arg0: i32) -> (i32, i32) {
    %c0_i32 = arith.constant 0 : i32
    %c0_i32_0 = arith.constant 0 : i32
    %c0_i32_1 = arith.constant 0 : i32
    return %c0_i32, %c0_i32_0 : i32, i32
  }
  func.func @transform_8(%arg0: i32) -> (i32, i32) {
    %c0_i32 = arith.constant 0 : i32
    %c0_i32_0 = arith.constant 0 : i32
    %c0_i32_1 = arith.constant 0 : i32
    return %c0_i32, %c0_i32_0 : i32, i32
  }
  func.func @transform_9(%arg0: i32) -> (i32, i32) {
    %c0_i32 = arith.constant 0 : i32
    %c0_i32_0 = arith.constant 0 : i32
    return %c0_i32, %arg0 : i32, i32
  }
}

</mosaic_0001>

<llo_original>
// kernel: tpu_custom_call.1
$region0: #{tpu_custom_call.1}
  #allocation0 [shape = 'u32[]', space=smem, size = 0x4, offset = 0x4, fixed_abs, tag = 'smem constant byte address 0x4 - core index']
  #allocation1 [shape = 'u32[72,128]{1,0:T(1,128)}', space=vmem, size = 0x9000, scoped, tag = 'internal scratch']
  %s0 = inlined_call_operand.vmem [shape: s32[2,1,1920], index: 0, kind: input, shape index: {}]
  %s1 = inlined_call_operand.vmem [shape: bf16[3,32,16], index: 1, kind: input, shape index: {}]
  %s2 = inlined_call_operand.vmem [shape: f32[32,1], index: 2, kind: input, shape index: {}]
  %s3 = inlined_call_operand.vmem [shape: bf16[3,32,32], index: 3, kind: input, shape index: {}]
  %s4 = inlined_call_operand.vmem [shape: f32[32,1], index: 4, kind: input, shape index: {}]
  %s5 = inlined_call_operand.vmem [shape: bf16[3,32,32], index: 5, kind: input, shape index: {}]
  %s6 = inlined_call_operand.vmem [shape: f32[32,1], index: 6, kind: input, shape index: {}]
  %s7 = inlined_call_operand.vmem [shape: bf16[8,32], index: 7, kind: input, shape index: {}]
  %s8 = inlined_call_operand.vmem [shape: f32[8,1], index: 8, kind: input, shape index: {}]
  %s9 = inlined_call_operand.hbm [shape: f32[8,256], index: 9, kind: output, shape index: {}]
  %s10 = sld [smem:[#allocation0]]
  $region69: #{tpu_custom_call.1} parent=0
    _
  %s12 = ssub.s32 1, %s10
  %s13 = scalar_select 0, %s12, %s10
  $region1: #{tpu_custom_call.1} parent=0
    #allocation2 [shape = 'u8[8192]{0}', space=vmem, size = 0x2000, scoped, tag = 'output window, operand 0']
    #allocation3 [shape = 's32[2]{0}', space=sflag, size = 0x8, scoped, tag = 'scoped memory for tpu_custom_call.1']
    %14 = vsyncpa [#allocation3], 0
    %s15 = scalar_lea.sflag [#allocation3], 1
    %16 = vsyncpa %s15, 0
    loop: start=0, step=1, limit=4
    $region2: #{tpu_custom_call.1} parent=1 // loop_pre_header
      _
    $region3: #{tpu_custom_call.1} parent=1 // loop_header
      %s18 = sphi 0, %s22
      %p19 = scmp.ge.s32.totalorder %s18, 4
      %s28 = sphi 0, %s30
      %s31 = sphi 0, %s28
      %s32 = sphi 0, %s31
      %s48 = sphi 0, %s32
      %s52 = sphi 0, %s52
      %s54 = sphi 0, %s52
      %s55 = sphi 0, %s54
      %s69 = sphi 0, %s55
      %s73 = sphi 0, %s73
      %s75 = sphi 0, %s73
      %s76 = sphi 0, %s75
      %s90 = sphi 0, %s76
      %s94 = sphi 0, %s94
      %s96 = sphi 0, %s94
      %s97 = sphi 0, %s96
      %s111 = sphi 0, %s97
      %s115 = sphi 0, %s115
      %s117 = sphi 0, %s115
      %s118 = sphi 0, %s117
      %s132 = sphi 0, %s118
      %s136 = sphi 0, %s136
      %s138 = sphi 0, %s136
      %s139 = sphi 0, %s138
      %s153 = sphi 0, %s139
      %s157 = sphi 0, %s157
      %s159 = sphi 0, %s157
      %s160 = sphi 0, %s159
      %s174 = sphi 0, %s160
      %s178 = sphi 0, %s178
      %s180 = sphi 0, %s178
      %s181 = sphi 0, %s180
      %s195 = sphi 0, %s181
      %s199 = sphi 0, %s199
      %s201 = sphi 0, %s199
      %s202 = sphi 0, %s201
      %s216 = sphi 0, %s202
      %s222 = sphi 0, %s224
      %s225 = sphi 0, %s222
      %s226 = sphi 0, %s225
      %s242 = sphi 0, %s226
    $region4: #{tpu_custom_call.1} parent=1 // loop_header_branch
      %21 = sbr.rel (%p19) target = $region8
    $region5: #{tpu_custom_call.1} parent=1 // loop_body
      %s23 = ssub.s32 %s18, 1
      %s24 = ssub.s32 %s18, 2
      %s25 = sadd.s32 %s18, 1
      %s26 = ssub.s32 %s18, %s25
      %p27 = scmp.eq.s32.totalorder %s26, 0
      %s29 = sadd.s32 %s28, 1
      %s30 = scalar_select %p27, %s28, %s29
      %p33 = pneg %p27
      %p34 = scmp.eq.s32.totalorder %s18, 1
      %p35 = por %p33, %p34
      %p36 = scmp.ne.s32.totalorder %s28, %s31
      %p37 = scmp.eq.s32.totalorder %s18, 0
      %p38 = por %p36, %p37
      %p39 = scmp.ne.s32.totalorder %s28, %s31
      %p40 = scmp.eq.s32.totalorder %s23, 1
      %p41 = por %p39, %p40
      %p42 = scmp.ne.s32.totalorder %s31, %s32
      %p43 = scmp.eq.s32.totalorder %s23, 0
      %p44 = por %p42, %p43
      %p45 = scmp.ne.s32.totalorder %s31, %s32
      %p46 = scmp.eq.s32.totalorder %s24, 1
      %p47 = por %p45, %p46
      %p49 = scmp.ne.s32.totalorder %s32, %s48
      %p50 = scmp.eq.s32.totalorder %s24, 0
      %p51 = por %p49, %p50
      %s53 = sadd.s32 %s52, 1
      %p56 = scmp.eq.s32.totalorder %s18, 1
      %p57 = scmp.ne.s32.totalorder %s52, %s54
      %p58 = scmp.eq.s32.totalorder %s18, 0
      %p59 = por %p57, %p58
      %p60 = scmp.ne.s32.totalorder %s52, %s54
      %p61 = scmp.eq.s32.totalorder %s23, 1
      %p62 = por %p60, %p61
      %p63 = scmp.ne.s32.totalorder %s54, %s55
      %p64 = scmp.eq.s32.totalorder %s23, 0
      %p65 = por %p63, %p64
      %p66 = scmp.ne.s32.totalorder %s54, %s55
      %p67 = scmp.eq.s32.totalorder %s24, 1
      %p68 = por %p66, %p67
      %p70 = scmp.ne.s32.totalorder %s55, %s69
      %p71 = scmp.eq.s32.totalorder %s24, 0
      %p72 = por %p70, %p71
      %s74 = sadd.s32 %s73, 1
      %p77 = scmp.eq.s32.totalorder %s18, 1
      %p78 = scmp.ne.s32.totalorder %s73, %s75
      %p79 = scmp.eq.s32.totalorder %s18, 0
      %p80 = por %p78, %p79
      %p81 = scmp.ne.s32.totalorder %s73, %s75
      %p82 = scmp.eq.s32.totalorder %s23, 1
      %p83 = por %p81, %p82
      %p84 = scmp.ne.s32.totalorder %s75, %s76
      %p85 = scmp.eq.s32.totalorder %s23, 0
      %p86 = por %p84, %p85
      %p87 = scmp.ne.s32.totalorder %s75, %s76
      %p88 = scmp.eq.s32.totalorder %s24, 1
      %p89 = por %p87, %p88
      %p91 = scmp.ne.s32.totalorder %s76, %s90
      %p92 = scmp.eq.s32.totalorder %s24, 0
      %p93 = por %p91, %p92
      %s95 = sadd.s32 %s94, 1
      %p98 = scmp.eq.s32.totalorder %s18, 1
      %p99 = scmp.ne.s32.totalorder %s94, %s96
      %p100 = scmp.eq.s32.totalorder %s18, 0
      %p101 = por %p99, %p100
      %p102 = scmp.ne.s32.totalorder %s94, %s96
      %p103 = scmp.eq.s32.totalorder %s23, 1
      %p104 = por %p102, %p103
      %p105 = scmp.ne.s32.totalorder %s96, %s97
      %p106 = scmp.eq.s32.totalorder %s23, 0
      %p107 = por %p105, %p106
      %p108 = scmp.ne.s32.totalorder %s96, %s97
      %p109 = scmp.eq.s32.totalorder %s24, 1
      %p110 = por %p108, %p109
      %p112 = scmp.ne.s32.totalorder %s97, %s111
      %p113 = scmp.eq.s32.totalorder %s24, 0
      %p114 = por %p112, %p113
      %s116 = sadd.s32 %s115, 1
      %p119 = scmp.eq.s32.totalorder %s18, 1
      %p120 = scmp.ne.s32.totalorder %s115, %s117
      %p121 = scmp.eq.s32.totalorder %s18, 0
      %p122 = por %p120, %p121
      %p123 = scmp.ne.s32.totalorder %s115, %s117
      %p124 = scmp.eq.s32.totalorder %s23, 1
      %p125 = por %p123, %p124
      %p126 = scmp.ne.s32.totalorder %s117, %s118
      %p127 = scmp.eq.s32.totalorder %s23, 0
      %p128 = por %p126, %p127
      %p129 = scmp.ne.s32.totalorder %s117, %s118
      %p130 = scmp.eq.s32.totalorder %s24, 1
      %p131 = por %p129, %p130
      %p133 = scmp.ne.s32.totalorder %s118, %s132
      %p134 = scmp.eq.s32.totalorder %s24, 0
      %p135 = por %p133, %p134
      %s137 = sadd.s32 %s136, 1
      %p140 = scmp.eq.s32.totalorder %s18, 1
      %p141 = scmp.ne.s32.totalorder %s136, %s138
      %p142 = scmp.eq.s32.totalorder %s18, 0
      %p143 = por %p141, %p142
      %p144 = scmp.ne.s32.totalorder %s136, %s138
      %p145 = scmp.eq.s32.totalorder %s23, 1
      %p146 = por %p144, %p145
      %p147 = scmp.ne.s32.totalorder %s138, %s139
      %p148 = scmp.eq.s32.totalorder %s23, 0
      %p149 = por %p147, %p148
      %p150 = scmp.ne.s32.totalorder %s138, %s139
      %p151 = scmp.eq.s32.totalorder %s24, 1
      %p152 = por %p150, %p151
      %p154 = scmp.ne.s32.totalorder %s139, %s153
      %p155 = scmp.eq.s32.totalorder %s24, 0
      %p156 = por %p154, %p155
      %s158 = sadd.s32 %s157, 1
      %p161 = scmp.eq.s32.totalorder %s18, 1
      %p162 = scmp.ne.s32.totalorder %s157, %s159
      %p163 = scmp.eq.s32.totalorder %s18, 0
      %p164 = por %p162, %p163
      %p165 = scmp.ne.s32.totalorder %s157, %s159
      %p166 = scmp.eq.s32.totalorder %s23, 1
      %p167 = por %p165, %p166
      %p168 = scmp.ne.s32.totalorder %s159, %s160
      %p169 = scmp.eq.s32.totalorder %s23, 0
      %p170 = por %p168, %p169
      %p171 = scmp.ne.s32.totalorder %s159, %s160
      %p172 = scmp.eq.s32.totalorder %s24, 1
      %p173 = por %p171, %p172
      %p175 = scmp.ne.s32.totalorder %s160, %s174
      %p176 = scmp.eq.s32.totalorder %s24, 0
      %p177 = por %p175, %p176
      %s179 = sadd.s32 %s178, 1
      %p182 = scmp.eq.s32.totalorder %s18, 1
      %p183 = scmp.ne.s32.totalorder %s178, %s180
      %p184 = scmp.eq.s32.totalorder %s18, 0
      %p185 = por %p183, %p184
      %p186 = scmp.ne.s32.totalorder %s178, %s180
      %p187 = scmp.eq.s32.totalorder %s23, 1
      %p188 = por %p186, %p187
      %p189 = scmp.ne.s32.totalorder %s180, %s181
      %p190 = scmp.eq.s32.totalorder %s23, 0
      %p191 = por %p189, %p190
      %p192 = scmp.ne.s32.totalorder %s180, %s181
      %p193 = scmp.eq.s32.totalorder %s24, 1
      %p194 = por %p192, %p193
      %p196 = scmp.ne.s32.totalorder %s181, %s195
      %p197 = scmp.eq.s32.totalorder %s24, 0
      %p198 = por %p196, %p197
      %s200 = sadd.s32 %s199, 1
      %p203 = scmp.eq.s32.totalorder %s18, 1
      %p204 = scmp.ne.s32.totalorder %s199, %s201
      %p205 = scmp.eq.s32.totalorder %s18, 0
      %p206 = por %p204, %p205
      %p207 = scmp.ne.s32.totalorder %s199, %s201
      %p208 = scmp.eq.s32.totalorder %s23, 1
      %p209 = por %p207, %p208
      %p210 = scmp.ne.s32.totalorder %s201, %s202
      %p211 = scmp.eq.s32.totalorder %s23, 0
      %p212 = por %p210, %p211
      %p213 = scmp.ne.s32.totalorder %s201, %s202
      %p214 = scmp.eq.s32.totalorder %s24, 1
      %p215 = por %p213, %p214
      %p217 = scmp.ne.s32.totalorder %s202, %s216
      %p218 = scmp.eq.s32.totalorder %s24, 0
      %p219 = por %p217, %p218
      %s220 = ssub.s32 %s18, %s25
      %p221 = scmp.eq.s32.totalorder %s220, 0
      %s223 = sadd.s32 %s222, 1
      %s224 = scalar_select %p221, %s222, %s223
      %p227 = pneg %p221
      %p228 = scmp.eq.s32.totalorder %s18, 1
      %p229 = por %p227, %p228
      %p230 = scmp.ne.s32.totalorder %s222, %s225
      %p231 = scmp.eq.s32.totalorder %s18, 0
      %p232 = por %p230, %p231
      %p233 = scmp.ne.s32.totalorder %s222, %s225
      %p234 = scmp.eq.s32.totalorder %s23, 1
      %p235 = por %p233, %p234
      %p236 = scmp.ne.s32.totalorder %s225, %s226
      %p237 = scmp.eq.s32.totalorder %s23, 0
      %p238 = por %p236, %p237
      %p239 = scmp.ne.s32.totalorder %s225, %s226
      %p240 = scmp.eq.s32.totalorder %s24, 1
      %p241 = por %p239, %p240
      %p243 = scmp.ne.s32.totalorder %s226, %s242
      %p244 = scmp.eq.s32.totalorder %s24, 0
      %p245 = por %p243, %p244
      %p246 = scmp.le.s32.totalorder 1, %s18
      %p247 = scmp.lt.s32.totalorder %s18, 3
      %p248 = pnand %p246, %p247
      %p249 = pneg %p248
      // Predicated region
      $region9: #{tpu_custom_call.1} parent=5 // pred_check
        _
      $region10: #{tpu_custom_call.1} parent=5 // pred_check_branch
        %251 = sbr.rel (%p248) target = $region12
      $region11: #{tpu_custom_call.1} parent=5 // pred_region
        %s252 = ssub.s32 %s18, 1
        // Predicated region
        $region13: #{tpu_custom_call.1} parent=11 // pred_check
          %p253 = pneg %p65
        $region14: #{tpu_custom_call.1} parent=11 // pred_check_branch
          %255 = sbr.rel (%p253) target = $region16
        $region15: #{tpu_custom_call.1} parent=11 // pred_region
          _
        $region16: #{tpu_custom_call.1} parent=11 // pred_fallthru
          _
        // Predicated region
        $region17: #{tpu_custom_call.1} parent=11 // pred_check
          %p256 = pneg %p86
        $region18: #{tpu_custom_call.1} parent=11 // pred_check_branch
          %258 = sbr.rel (%p256) target = $region20
        $region19: #{tpu_custom_call.1} parent=11 // pred_region
          _
        $region20: #{tpu_custom_call.1} parent=11 // pred_fallthru
          _
        // Predicated region
        $region21: #{tpu_custom_call.1} parent=11 // pred_check
          %p259 = pneg %p107
        $region22: #{tpu_custom_call.1} parent=11 // pred_check_branch
          %261 = sbr.rel (%p259) target = $region24
        $region23: #{tpu_custom_call.1} parent=11 // pred_region
          _
        $region24: #{tpu_custom_call.1} parent=11 // pred_fallthru
          _
        // Predicated region
        $region25: #{tpu_custom_call.1} parent=11 // pred_check
          %p262 = pneg %p128
        $region26: #{tpu_custom_call.1} parent=11 // pred_check_branch
          %264 = sbr.rel (%p262) target = $region28
        $region27: #{tpu_custom_call.1} parent=11 // pred_region
          _
        $region28: #{tpu_custom_call.1} parent=11 // pred_fallthru
          _
        // Predicated region
        $region29: #{tpu_custom_call.1} parent=11 // pred_check
          %p265 = pneg %p149
        $region30: #{tpu_custom_call.1} parent=11 // pred_check_branch
          %267 = sbr.rel (%p265) target = $region32
        $region31: #{tpu_custom_call.1} parent=11 // pred_region
          _
        $region32: #{tpu_custom_call.1} parent=11 // pred_fallthru
          _
        // Predicated region
        $region33: #{tpu_custom_call.1} parent=11 // pred_check
          %p268 = pneg %p170
        $region34: #{tpu_custom_call.1} parent=11 // pred_check_branch
          %270 = sbr.rel (%p268) target = $region36
        $region35: #{tpu_custom_call.1} parent=11 // pred_region
          _
        $region36: #{tpu_custom_call.1} parent=11 // pred_fallthru
          _
        // Predicated region
        $region37: #{tpu_custom_call.1} parent=11 // pred_check
          %p271 = pneg %p191
        $region38: #{tpu_custom_call.1} parent=11 // pred_check_branch
          %273 = sbr.rel (%p271) target = $region40
        $region39: #{tpu_custom_call.1} parent=11 // pred_region
          _
        $region40: #{tpu_custom_call.1} parent=11 // pred_fallthru
          _
        // Predicated region
        $region41: #{tpu_custom_call.1} parent=11 // pred_check
          %p274 = pneg %p212
        $region42: #{tpu_custom_call.1} parent=11 // pred_check_branch
          %276 = sbr.rel (%p274) target = $region44
        $region43: #{tpu_custom_call.1} parent=11 // pred_region
          _
        $region44: #{tpu_custom_call.1} parent=11 // pred_fallthru
          _
      $region12: #{tpu_custom_call.1} parent=5 // pred_fallthru
        _
      %p277 = scmp.lt.s32.totalorder %s18, 2
      // Predicated region
      $region45: #{tpu_custom_call.1} parent=5 // pred_check
        %p278 = pneg %p277
      $region46: #{tpu_custom_call.1} parent=5 // pred_check_branch
        %280 = sbr.rel (%p278) target = $region48
      $region47: #{tpu_custom_call.1} parent=5 // pred_region
        // Predicated region
        $region49: #{tpu_custom_call.1} parent=47 // pred_check
          %p281 = pneg %p38
        $region50: #{tpu_custom_call.1} parent=47 // pred_check_branch
          %283 = sbr.rel (%p281) target = $region52
        $region51: #{tpu_custom_call.1} parent=47 // pred_region
          %p284 = scmp.lt.s32.totalorder %s18, 1
          %s285 = scalar_select %p284, %s18, 1
          %s286 = smul.addr %s285, 15
          %s287 = scalar_lea.vmem %s0, %s286
        $region52: #{tpu_custom_call.1} parent=47 // pred_fallthru
          _
      $region48: #{tpu_custom_call.1} parent=5 // pred_fallthru
        _
      %p288 = scmp.le.s32.totalorder 1, %s18
      %p289 = scmp.lt.s32.totalorder %s18, 3
      %p290 = pnand %p288, %p289
      %p291 = pneg %p290
      // Predicated region
      $region53: #{tpu_custom_call.1} parent=5 // pred_check
        _
      $region54: #{tpu_custom_call.1} parent=5 // pred_check_branch
        %293 = sbr.rel (%p290) target = $region56
      $region55: #{tpu_custom_call.1} parent=5 // pred_region
        %s294 = ssub.s32 %s18, 1
        %p295 = scmp.lt.s32.totalorder %s23, 1
        %s296 = scalar_select %p295, %s23, 1
        %s297 = smul.addr %s296, 15
        %s298 = scalar_lea.vmem %s0, %s297
        %p299 = pneg %p44
        %p300 = pneg %p41
        %p301 = pneg %p65
        %p302 = pneg %p62
        %p303 = pneg %p86
        %p304 = pneg %p83
        %p305 = pneg %p107
        %p306 = pneg %p104
        %p307 = pneg %p128
        %p308 = pneg %p125
        %p309 = pneg %p149
        %p310 = pneg %p146
        %p311 = pneg %p170
        %p312 = pneg %p167
        %p313 = pneg %p191
        %p314 = pneg %p188
        %p315 = pneg %p212
        %p316 = pneg %p209
        %p317 = pneg %p238
        %p318 = pneg %p235
        %s319 = sand.u32 %s225, 1
        %s320 = scalar_lea.sflag [#allocation3], %s319
        %s321 = sand.u32 %s225, 1
        %s322 = smul.addr %s321, 8
        %s323 = scalar_lea.vmem [#allocation2], %s322
        %p324 = scmp.lt.s32.totalorder %s23, 1
        %s325 = scalar_select %p324, %s23, 1
        %s326 = smul.addr %s325, 15
        %s327 = scalar_lea.vmem %s0, %s326
        %v329 = vld [vmem:[%s327] sm:$0xff]
        %v330 = vld [vmem:[%s327 + $0x8] sm:$0xff]
        %v331 = vlaneseq
        %v332 = vshrl.u32 %v331, 7
        %v333 = vadd.s32 %v332, 8
        %v334 = vperm.slane %v329, 0
        %v335 = vperm.slane %v329, 1
        %v336 = vperm.slane %v329, 2
        %v337 = vperm.slane %v329, 3
        %v338 = vperm.slane %v329, 4
        %v339 = vperm.slane %v329, 5
        %v340 = vperm.slane %v329, 6
        %v341 = vperm.slane %v329, 7
        %v342 = vperm.slane %v330, 0
        %v343 = vperm.slane %v330, 1
        %v344 = vperm.slane %v330, 2
        %v345 = vperm.slane %v330, 3
        %v346 = vperm.slane %v330, 4
        %v347 = vperm.slane %v330, 5
        %v348 = vperm.slane %v330, 6
        %vm349 = vcmp.eq.s32.totalorder %v332, %v334
        %vm350 = vcmp.eq.s32.totalorder %v332, %v335
        %vm351 = vcmp.eq.s32.totalorder %v332, %v336
        %vm352 = vcmp.eq.s32.totalorder %v332, %v337
        %vm353 = vcmp.eq.s32.totalorder %v332, %v338
        %vm354 = vcmp.eq.s32.totalorder %v332, %v339
        %vm355 = vcmp.eq.s32.totalorder %v332, %v340
        %vm356 = vcmp.eq.s32.totalorder %v332, %v341
        %vm357 = vcmp.eq.s32.totalorder %v332, %v342
        %vm358 = vcmp.eq.s32.totalorder %v332, %v343
        %vm359 = vcmp.eq.s32.totalorder %v332, %v344
        %vm360 = vcmp.eq.s32.totalorder %v332, %v345
        %vm361 = vcmp.eq.s32.totalorder %v332, %v346
        %vm362 = vcmp.eq.s32.totalorder %v332, %v347
        %vm363 = vcmp.eq.s32.totalorder %v332, %v348
        %vm364 = vcmp.eq.s32.totalorder %v333, %v334
        %vm365 = vcmp.eq.s32.totalorder %v333, %v335
        %vm366 = vcmp.eq.s32.totalorder %v333, %v336
        %vm367 = vcmp.eq.s32.totalorder %v333, %v337
        %vm368 = vcmp.eq.s32.totalorder %v333, %v338
        %vm369 = vcmp.eq.s32.totalorder %v333, %v339
        %vm370 = vcmp.eq.s32.totalorder %v333, %v340
        %vm371 = vcmp.eq.s32.totalorder %v333, %v341
        %vm372 = vcmp.eq.s32.totalorder %v333, %v342
        %vm373 = vcmp.eq.s32.totalorder %v333, %v343
        %vm374 = vcmp.eq.s32.totalorder %v333, %v344
        %vm375 = vcmp.eq.s32.totalorder %v333, %v345
        %vm376 = vcmp.eq.s32.totalorder %v333, %v346
        %vm377 = vcmp.eq.s32.totalorder %v333, %v347
        %vm378 = vcmp.eq.s32.totalorder %v333, %v348
        %v379 = vsel %vm349, 1, 0
        %v380 = vsel %vm350, 1, 0
        %v381 = vsel %vm351, 1, 0
        %v382 = vsel %vm352, 1, 0
        %v383 = vsel %vm353, 1, 0
        %v384 = vsel %vm354, 1, 0
        %v385 = vsel %vm355, 1, 0
        %v386 = vsel %vm356, 1, 0
        %v387 = vsel %vm357, 1, 0
        %v388 = vsel %vm358, 1, 0
        %v389 = vsel %vm359, 1, 0
        %v390 = vsel %vm360, 1, 0
        %v391 = vsel %vm361, 1, 0
        %v392 = vsel %vm362, 1, 0
        %v393 = vsel %vm363, 1, 0
        %v394 = vsel %vm364, 1, 0
        %v395 = vsel %vm365, 1, 0
        %v396 = vsel %vm366, 1, 0
        %v397 = vsel %vm367, 1, 0
        %v398 = vsel %vm368, 1, 0
        %v399 = vsel %vm369, 1, 0
        %v400 = vsel %vm370, 1, 0
        %v401 = vsel %vm371, 1, 0
        %v402 = vsel %vm372, 1, 0
        %v403 = vsel %vm373, 1, 0
        %v404 = vsel %vm374, 1, 0
        %v405 = vsel %vm375, 1, 0
        %v406 = vsel %vm376, 1, 0
        %v407 = vsel %vm377, 1, 0
        %v408 = vsel %vm378, 1, 0
        %v409 = vcvt.s32.f32 %v379
        %v410 = vcvt.s32.f32 %v380
        %v411 = vcvt.s32.f32 %v381
        %v412 = vcvt.s32.f32 %v382
        %v413 = vcvt.s32.f32 %v383
        %v414 = vcvt.s32.f32 %v384
        %v415 = vcvt.s32.f32 %v385
        %v416 = vcvt.s32.f32 %v386
        %v417 = vcvt.s32.f32 %v387
        %v418 = vcvt.s32.f32 %v388
        %v419 = vcvt.s32.f32 %v389
        %v420 = vcvt.s32.f32 %v390
        %v421 = vcvt.s32.f32 %v391
        %v422 = vcvt.s32.f32 %v392
        %v423 = vcvt.s32.f32 %v393
        %v424 = vcvt.s32.f32 %v394
        %v425 = vcvt.s32.f32 %v395
        %v426 = vcvt.s32.f32 %v396
        %v427 = vcvt.s32.f32 %v397
        %v428 = vcvt.s32.f32 %v398
        %v429 = vcvt.s32.f32 %v399
        %v430 = vcvt.s32.f32 %v400
        %v431 = vcvt.s32.f32 %v401
        %v432 = vcvt.s32.f32 %v402
        %v433 = vcvt.s32.f32 %v403
        %v434 = vcvt.s32.f32 %v404
        %v435 = vcvt.s32.f32 %v405
        %v436 = vcvt.s32.f32 %v406
        %v437 = vcvt.s32.f32 %v407
        %v438 = vcvt.s32.f32 %v408
        %v439 = vpack.c.bf16 %v410, %v409
        %v440 = vpack.c.bf16 %v412, %v411
        %v441 = vpack.c.bf16 %v414, %v413
        %v442 = vpack.c.bf16 %v416, %v415
        %v443 = vpack.c.bf16 %v418, %v417
        %v444 = vpack.c.bf16 %v420, %v419
        %v445 = vpack.c.bf16 %v422, %v421
        %v446 = vpack.c.bf16 %v423, %v423
        %v447 = vpack.c.bf16 %v425, %v424
        %v448 = vpack.c.bf16 %v427, %v426
        %v449 = vpack.c.bf16 %v429, %v428
        %v450 = vpack.c.bf16 %v431, %v430
        %v451 = vpack.c.bf16 %v433, %v432
        %v452 = vpack.c.bf16 %v435, %v434
        %v453 = vpack.c.bf16 %v437, %v436
        %v454 = vpack.c.bf16 %v438, %v438
        %v455 = vld [vmem:[%s1] sm:$0xf]
        %v456 = vld [vmem:[%s1 + $0x4] sm:$0xf]
        %v457 = vld [vmem:[%s1 + $0x8] sm:$0xf]
        %v458 = vld [vmem:[%s1 + $0xc] sm:$0xf]
        %v459 = vld [vmem:[%s1 + $0x10] sm:$0xf]
        %v460 = vld [vmem:[%s1 + $0x14] sm:$0xf]
        %v461 = vld [vmem:[%s1 + $0x18] sm:$0xf]
        %v462 = vld [vmem:[%s1 + $0x1c] sm:$0xf]
        %v463 = vld [vmem:[%s1 + $0x20] sm:$0xf]
        %v464 = vld [vmem:[%s1 + $0x24] sm:$0xf]
        %v465 = vld [vmem:[%s1 + $0x28] sm:$0xf]
        %v466 = vld [vmem:[%s1 + $0x2c] sm:$0xf]
        %v467 = vld [vmem:[%s2] sm:$0xff]
        %v468 = vld [vmem:[%s2 + $0x8] sm:$0xff]
        %v469 = vld [vmem:[%s2 + $0x10] sm:$0xff]
        %v470 = vld [vmem:[%s2 + $0x18] sm:$0xff]
        %v475 = vunpack.c.l.b16 %v459
        %v476 = vunpack.c.l.b16 %v460
        %v477 = vunpack.c.l.b16 %v461
        %v478 = vunpack.c.l.b16 %v462
        %v479 = vpack.c.b16 %v476, %v475
        %v480 = vpack.c.b16 %v478, %v477
        %v495 = vunpack.c.h.b16 %v439
        %v496 = vunpack.c.l.b16 %v440
        %v497 = vunpack.c.h.b16 %v440
        %v498 = vunpack.c.l.b16 %v441
        %v499 = vunpack.c.h.b16 %v441
        %v500 = vunpack.c.l.b16 %v442
        %v501 = vunpack.c.h.b16 %v442
        %v502 = vunpack.c.l.b16 %v443
        %v503 = vunpack.c.h.b16 %v443
        %v504 = vunpack.c.l.b16 %v444
        %v505 = vunpack.c.h.b16 %v444
        %v506 = vunpack.c.l.b16 %v445
        %v507 = vunpack.c.h.b16 %v445
        %v508 = vunpack.c.h.b16 %v447
        %v509 = vunpack.c.l.b16 %v448
        %v510 = vunpack.c.h.b16 %v448
        %v511 = vunpack.c.l.b16 %v449
        %v512 = vunpack.c.h.b16 %v449
        %v513 = vunpack.c.l.b16 %v450
        %v514 = vunpack.c.h.b16 %v450
        %v515 = vunpack.c.l.b16 %v451
        %v516 = vunpack.c.h.b16 %v451
        %v517 = vunpack.c.l.b16 %v452
        %v518 = vunpack.c.h.b16 %v452
        %v519 = vunpack.c.l.b16 %v453
        %v520 = vunpack.c.h.b16 %v453
        %v521 = vpack.c.b16 %v508, %v495
        %v522 = vpack.c.b16 %v509, %v496
        %v523 = vpack.c.b16 %v510, %v497
        %v524 = vpack.c.b16 %v511, %v498
        %v525 = vpack.c.b16 %v512, %v499
        %v526 = vpack.c.b16 %v513, %v500
        %v527 = vpack.c.b16 %v514, %v501
        %v528 = vpack.c.b16 %v515, %v502
        %v529 = vpack.c.b16 %v516, %v503
        %v530 = vpack.c.b16 %v517, %v504
        %v531 = vpack.c.b16 %v518, %v505
        %v532 = vpack.c.b16 %v519, %v506
        %v533 = vpack.c.b16 %v520, %v507
        %vm547 = vcmask 130048
        %v549 = vsel %vm547, %v479, 0
        %v552 = vsel %vm547, %v480, 0
        %554 = vmatpush.bf16.msra.mxu0 0
        %555 = vmatpush.bf16.msra.mxu0 0
        %556 = vmatpush.bf16.msra.mxu0 0
        %557 = vmatpush.bf16.msra.mxu0 0
        %558 = vmatpush.bf16.msra.mxu0 0
        %559 = vmatpush.bf16.msra.mxu0 0
        %560 = vmatpush.bf16.msra.mxu0 0
        %561 = vmatpush.bf16.msra.mxu0 %v521
        %562 = vmatmul.bf16.gmra.mxu0 %v549
        %v563 = vpop.f32.mrf.mxu0
        %v564 = vadd.f32 0.0, %v563
        %v565 = vpop.f32.mrf.mxu0
        %v566 = vadd.f32 0.0, %v565
        %567 = vmatmul.bf16.gmra.mxu0 %v552
        %v568 = vpop.f32.mrf.mxu0
        %v569 = vadd.f32 0.0, %v568
        %v570 = vpop.f32.mrf.mxu0
        %v571 = vadd.f32 0.0, %v570
        %572 = vdwg.mxu0
        %573 = vmatpush.bf16.msra.mxu0 0
        %574 = vmatpush.bf16.msra.mxu0 0
        %575 = vmatpush.bf16.msra.mxu0 0
        %576 = vmatpush.bf16.msra.mxu0 0
        %577 = vmatpush.bf16.msra.mxu0 0
        %578 = vmatpush.bf16.msra.mxu0 0
        %579 = vmatpush.bf16.msra.mxu0 0
        %580 = vmatpush.bf16.msra.mxu0 %v522
        %581 = vmatmul.bf16.gmra.mxu0 %v549
        %v582 = vpop.f32.mrf.mxu0
        %v583 = vadd.f32 0.0, %v582
        %v584 = vpop.f32.mrf.mxu0
        %v585 = vadd.f32 0.0, %v584
        %586 = vmatmul.bf16.gmra.mxu0 %v552
        %v587 = vpop.f32.mrf.mxu0
        %v588 = vadd.f32 0.0, %v587
        %v589 = vpop.f32.mrf.mxu0
        %v590 = vadd.f32 0.0, %v589
        %591 = vdwg.mxu0
        %592 = vmatpush.bf16.msra.mxu0 0
        %593 = vmatpush.bf16.msra.mxu0 0
        %594 = vmatpush.bf16.msra.mxu0 0
        %595 = vmatpush.bf16.msra.mxu0 0
        %596 = vmatpush.bf16.msra.mxu0 0
        %597 = vmatpush.bf16.msra.mxu0 0
        %598 = vmatpush.bf16.msra.mxu0 0
        %599 = vmatpush.bf16.msra.mxu0 %v523
        %600 = vmatmul.bf16.gmra.mxu0 %v549
        %v601 = vpop.f32.mrf.mxu0
        %v602 = vadd.f32 0.0, %v601
        %v603 = vpop.f32.mrf.mxu0
        %v604 = vadd.f32 0.0, %v603
        %605 = vmatmul.bf16.gmra.mxu0 %v552
        %v606 = vpop.f32.mrf.mxu0
        %v607 = vadd.f32 0.0, %v606
        %v608 = vpop.f32.mrf.mxu0
        %v609 = vadd.f32 0.0, %v608
        %610 = vdwg.mxu0
        %611 = vmatpush.bf16.msra.mxu0 0
        %612 = vmatpush.bf16.msra.mxu0 0
        %613 = vmatpush.bf16.msra.mxu0 0
        %614 = vmatpush.bf16.msra.mxu0 0
        %615 = vmatpush.bf16.msra.mxu0 0
        %616 = vmatpush.bf16.msra.mxu0 0
        %617 = vmatpush.bf16.msra.mxu0 0
        %618 = vmatpush.bf16.msra.mxu0 %v524
        %619 = vmatmul.bf16.gmra.mxu0 %v549
        %v620 = vpop.f32.mrf.mxu0
        %v621 = vadd.f32 0.0, %v620
        %v622 = vpop.f32.mrf.mxu0
        %v623 = vadd.f32 0.0, %v622
        %624 = vmatmul.bf16.gmra.mxu0 %v552
        %v625 = vpop.f32.mrf.mxu0
        %v626 = vadd.f32 0.0, %v625
        %v627 = vpop.f32.mrf.mxu0
        %v628 = vadd.f32 0.0, %v627
        %629 = vdwg.mxu0
        %630 = vmatpush.bf16.msra.mxu0 0
        %631 = vmatpush.bf16.msra.mxu0 0
        %632 = vmatpush.bf16.msra.mxu0 0
        %633 = vmatpush.bf16.msra.mxu0 0
        %634 = vmatpush.bf16.msra.mxu0 0
        %635 = vmatpush.bf16.msra.mxu0 0
        %636 = vmatpush.bf16.msra.mxu0 0
        %637 = vmatpush.bf16.msra.mxu0 %v525
        %638 = vmatmul.bf16.gmra.mxu0 %v549
        %v639 = vpop.f32.mrf.mxu0
        %v640 = vadd.f32 0.0, %v639
        %v641 = vpop.f32.mrf.mxu0
        %v642 = vadd.f32 0.0, %v641
        %643 = vmatmul.bf16.gmra.mxu0 %v552
        %v644 = vpop.f32.mrf.mxu0
        %v645 = vadd.f32 0.0, %v644
        %v646 = vpop.f32.mrf.mxu0
        %v647 = vadd.f32 0.0, %v646
        %648 = vdwg.mxu0
        %649 = vmatpush.bf16.msra.mxu0 0
        %650 = vmatpush.bf16.msra.mxu0 0
        %651 = vmatpush.bf16.msra.mxu0 0
        %652 = vmatpush.bf16.msra.mxu0 0
        %653 = vmatpush.bf16.msra.mxu0 0
        %654 = vmatpush.bf16.msra.mxu0 0
        %655 = vmatpush.bf16.msra.mxu0 0
        %656 = vmatpush.bf16.msra.mxu0 %v526
        %657 = vmatmul.bf16.gmra.mxu0 %v549
        %v658 = vpop.f32.mrf.mxu0
        %v659 = vadd.f32 0.0, %v658
        %v660 = vpop.f32.mrf.mxu0
        %v661 = vadd.f32 0.0, %v660
        %662 = vmatmul.bf16.gmra.mxu0 %v552
        %v663 = vpop.f32.mrf.mxu0
        %v664 = vadd.f32 0.0, %v663
        %v665 = vpop.f32.mrf.mxu0
        %v666 = vadd.f32 0.0, %v665
        %667 = vdwg.mxu0
        %668 = vmatpush.bf16.msra.mxu0 0
        %669 = vmatpush.bf16.msra.mxu0 0
        %670 = vmatpush.bf16.msra.mxu0 0
        %671 = vmatpush.bf16.msra.mxu0 0
        %672 = vmatpush.bf16.msra.mxu0 0
        %673 = vmatpush.bf16.msra.mxu0 0
        %674 = vmatpush.bf16.msra.mxu0 0
        %675 = vmatpush.bf16.msra.mxu0 %v527
        %676 = vmatmul.bf16.gmra.mxu0 %v549
        %v677 = vpop.f32.mrf.mxu0
        %v678 = vadd.f32 0.0, %v677
        %v679 = vpop.f32.mrf.mxu0
        %v680 = vadd.f32 0.0, %v679
        %681 = vmatmul.bf16.gmra.mxu0 %v552
        %v682 = vpop.f32.mrf.mxu0
        %v683 = vadd.f32 0.0, %v682
        %v684 = vpop.f32.mrf.mxu0
        %v685 = vadd.f32 0.0, %v684
        %686 = vdwg.mxu0
        %687 = vmatpush.bf16.msra.mxu0 0
        %688 = vmatpush.bf16.msra.mxu0 0
        %689 = vmatpush.bf16.msra.mxu0 0
        %690 = vmatpush.bf16.msra.mxu0 0
        %691 = vmatpush.bf16.msra.mxu0 0
        %692 = vmatpush.bf16.msra.mxu0 0
        %693 = vmatpush.bf16.msra.mxu0 0
        %694 = vmatpush.bf16.msra.mxu0 %v528
        %695 = vmatmul.bf16.gmra.mxu0 %v549
        %v696 = vpop.f32.mrf.mxu0
        %v697 = vadd.f32 0.0, %v696
        %v698 = vpop.f32.mrf.mxu0
        %v699 = vadd.f32 0.0, %v698
        %700 = vmatmul.bf16.gmra.mxu0 %v552
        %v701 = vpop.f32.mrf.mxu0
        %v702 = vadd.f32 0.0, %v701
        %v703 = vpop.f32.mrf.mxu0
        %v704 = vadd.f32 0.0, %v703
        %705 = vdwg.mxu0
        %706 = vmatpush.bf16.msra.mxu0 0
        %707 = vmatpush.bf16.msra.mxu0 0
        %708 = vmatpush.bf16.msra.mxu0 0
        %709 = vmatpush.bf16.msra.mxu0 0
        %710 = vmatpush.bf16.msra.mxu0 0
        %711 = vmatpush.bf16.msra.mxu0 0
        %712 = vmatpush.bf16.msra.mxu0 0
        %713 = vmatpush.bf16.msra.mxu0 %v529
        %714 = vmatmul.bf16.gmra.mxu0 %v549
        %v715 = vpop.f32.mrf.mxu0
        %v716 = vadd.f32 0.0, %v715
        %v717 = vpop.f32.mrf.mxu0
        %v718 = vadd.f32 0.0, %v717
        %719 = vmatmul.bf16.gmra.mxu0 %v552
        %v720 = vpop.f32.mrf.mxu0
        %v721 = vadd.f32 0.0, %v720
        %v722 = vpop.f32.mrf.mxu0
        %v723 = vadd.f32 0.0, %v722
        %724 = vdwg.mxu0
        %725 = vmatpush.bf16.msra.mxu0 0
        %726 = vmatpush.bf16.msra.mxu0 0
        %727 = vmatpush.bf16.msra.mxu0 0
        %728 = vmatpush.bf16.msra.mxu0 0
        %729 = vmatpush.bf16.msra.mxu0 0
        %730 = vmatpush.bf16.msra.mxu0 0
        %731 = vmatpush.bf16.msra.mxu0 0
        %732 = vmatpush.bf16.msra.mxu0 %v530
        %733 = vmatmul.bf16.gmra.mxu0 %v549
        %v734 = vpop.f32.mrf.mxu0
        %v735 = vadd.f32 0.0, %v734
        %v736 = vpop.f32.mrf.mxu0
        %v737 = vadd.f32 0.0, %v736
        %738 = vmatmul.bf16.gmra.mxu0 %v552
        %v739 = vpop.f32.mrf.mxu0
        %v740 = vadd.f32 0.0, %v739
        %v741 = vpop.f32.mrf.mxu0
        %v742 = vadd.f32 0.0, %v741
        %743 = vdwg.mxu0
        %744 = vmatpush.bf16.msra.mxu0 0
        %745 = vmatpush.bf16.msra.mxu0 0
        %746 = vmatpush.bf16.msra.mxu0 0
        %747 = vmatpush.bf16.msra.mxu0 0
        %748 = vmatpush.bf16.msra.mxu0 0
        %749 = vmatpush.bf16.msra.mxu0 0
        %750 = vmatpush.bf16.msra.mxu0 0
        %751 = vmatpush.bf16.msra.mxu0 %v531
        %752 = vmatmul.bf16.gmra.mxu0 %v549
        %v753 = vpop.f32.mrf.mxu0
        %v754 = vadd.f32 0.0, %v753
        %v755 = vpop.f32.mrf.mxu0
        %v756 = vadd.f32 0.0, %v755
        %757 = vmatmul.bf16.gmra.mxu0 %v552
        %v758 = vpop.f32.mrf.mxu0
        %v759 = vadd.f32 0.0, %v758
        %v760 = vpop.f32.mrf.mxu0
        %v761 = vadd.f32 0.0, %v760
        %762 = vdwg.mxu0
        %763 = vmatpush.bf16.msra.mxu0 0
        %764 = vmatpush.bf16.msra.mxu0 0
        %765 = vmatpush.bf16.msra.mxu0 0
        %766 = vmatpush.bf16.msra.mxu0 0
        %767 = vmatpush.bf16.msra.mxu0 0
        %768 = vmatpush.bf16.msra.mxu0 0
        %769 = vmatpush.bf16.msra.mxu0 0
        %770 = vmatpush.bf16.msra.mxu0 %v532
        %771 = vmatmul.bf16.gmra.mxu0 %v549
        %v772 = vpop.f32.mrf.mxu0
        %v773 = vadd.f32 0.0, %v772
        %v774 = vpop.f32.mrf.mxu0
        %v775 = vadd.f32 0.0, %v774
        %776 = vmatmul.bf16.gmra.mxu0 %v552
        %v777 = vpop.f32.mrf.mxu0
        %v778 = vadd.f32 0.0, %v777
        %v779 = vpop.f32.mrf.mxu0
        %v780 = vadd.f32 0.0, %v779
        %781 = vdwg.mxu0
        %782 = vmatpush.bf16.msra.mxu0 0
        %783 = vmatpush.bf16.msra.mxu0 0
        %784 = vmatpush.bf16.msra.mxu0 0
        %785 = vmatpush.bf16.msra.mxu0 0
        %786 = vmatpush.bf16.msra.mxu0 0
        %787 = vmatpush.bf16.msra.mxu0 0
        %788 = vmatpush.bf16.msra.mxu0 0
        %789 = vmatpush.bf16.msra.mxu0 %v533
        %790 = vmatmul.bf16.gmra.mxu0 %v549
        %v791 = vpop.f32.mrf.mxu0
        %v792 = vadd.f32 0.0, %v791
        %v793 = vpop.f32.mrf.mxu0
        %v794 = vadd.f32 0.0, %v793
        %795 = vmatmul.bf16.gmra.mxu0 %v552
        %v796 = vpop.f32.mrf.mxu0
        %v797 = vadd.f32 0.0, %v796
        %v798 = vpop.f32.mrf.mxu0
        %v799 = vadd.f32 0.0, %v798
        %800 = vdwg.mxu0
        %v805 = vunpack.c.l.b16 %v455
        %v806 = vunpack.c.l.b16 %v456
        %v807 = vunpack.c.l.b16 %v457
        %v808 = vunpack.c.l.b16 %v458
        %v809 = vpack.c.b16 %v806, %v805
        %v810 = vpack.c.b16 %v808, %v807
        %v811 = vunpack.c.l.b16 %v439
        %v812 = vunpack.c.l.b16 %v447
        %v813 = vpack.c.b16 %v812, %v811
        %v816 = vsel %vm547, %v809, 0
        %v819 = vsel %vm547, %v810, 0
        %821 = vmatpush.bf16.msra.mxu0 0
        %822 = vmatpush.bf16.msra.mxu0 0
        %823 = vmatpush.bf16.msra.mxu0 0
        %824 = vmatpush.bf16.msra.mxu0 0
        %825 = vmatpush.bf16.msra.mxu0 0
        %826 = vmatpush.bf16.msra.mxu0 0
        %827 = vmatpush.bf16.msra.mxu0 0
        %828 = vmatpush.bf16.msra.mxu0 %v813
        %829 = vmatmul.bf16.gmra.mxu0 %v816
        %v830 = vpop.f32.mrf.mxu0
        %v831 = vadd.f32 %v564, %v830
        %v832 = vpop.f32.mrf.mxu0
        %v833 = vadd.f32 %v566, %v832
        %834 = vmatmul.bf16.gmra.mxu0 %v819
        %v835 = vpop.f32.mrf.mxu0
        %v836 = vadd.f32 %v569, %v835
        %v837 = vpop.f32.mrf.mxu0
        %v838 = vadd.f32 %v571, %v837
        %839 = vdwg.mxu0
        %840 = vmatpush.bf16.msra.mxu0 0
        %841 = vmatpush.bf16.msra.mxu0 0
        %842 = vmatpush.bf16.msra.mxu0 0
        %843 = vmatpush.bf16.msra.mxu0 0
        %844 = vmatpush.bf16.msra.mxu0 0
        %845 = vmatpush.bf16.msra.mxu0 0
        %846 = vmatpush.bf16.msra.mxu0 0
        %847 = vmatpush.bf16.msra.mxu0 %v521
        %848 = vmatmul.bf16.gmra.mxu0 %v816
        %v849 = vpop.f32.mrf.mxu0
        %v850 = vadd.f32 %v583, %v849
        %v851 = vpop.f32.mrf.mxu0
        %v852 = vadd.f32 %v585, %v851
        %853 = vmatmul.bf16.gmra.mxu0 %v819
        %v854 = vpop.f32.mrf.mxu0
        %v855 = vadd.f32 %v588, %v854
        %v856 = vpop.f32.mrf.mxu0
        %v857 = vadd.f32 %v590, %v856
        %858 = vdwg.mxu0
        %859 = vmatpush.bf16.msra.mxu0 0
        %860 = vmatpush.bf16.msra.mxu0 0
        %861 = vmatpush.bf16.msra.mxu0 0
        %862 = vmatpush.bf16.msra.mxu0 0
        %863 = vmatpush.bf16.msra.mxu0 0
        %864 = vmatpush.bf16.msra.mxu0 0
        %865 = vmatpush.bf16.msra.mxu0 0
        %866 = vmatpush.bf16.msra.mxu0 %v522
        %867 = vmatmul.bf16.gmra.mxu0 %v816
        %v868 = vpop.f32.mrf.mxu0
        %v869 = vadd.f32 %v602, %v868
        %v870 = vpop.f32.mrf.mxu0
        %v871 = vadd.f32 %v604, %v870
        %872 = vmatmul.bf16.gmra.mxu0 %v819
        %v873 = vpop.f32.mrf.mxu0
        %v874 = vadd.f32 %v607, %v873
        %v875 = vpop.f32.mrf.mxu0
        %v876 = vadd.f32 %v609, %v875
        %877 = vdwg.mxu0
        %878 = vmatpush.bf16.msra.mxu0 0
        %879 = vmatpush.bf16.msra.mxu0 0
        %880 = vmatpush.bf16.msra.mxu0 0
        %881 = vmatpush.bf16.msra.mxu0 0
        %882 = vmatpush.bf16.msra.mxu0 0
        %883 = vmatpush.bf16.msra.mxu0 0
        %884 = vmatpush.bf16.msra.mxu0 0
        %885 = vmatpush.bf16.msra.mxu0 %v523
        %886 = vmatmul.bf16.gmra.mxu0 %v816
        %v887 = vpop.f32.mrf.mxu0
        %v888 = vadd.f32 %v621, %v887
        %v889 = vpop.f32.mrf.mxu0
        %v890 = vadd.f32 %v623, %v889
        %891 = vmatmul.bf16.gmra.mxu0 %v819
        %v892 = vpop.f32.mrf.mxu0
        %v893 = vadd.f32 %v626, %v892
        %v894 = vpop.f32.mrf.mxu0
        %v895 = vadd.f32 %v628, %v894
        %896 = vdwg.mxu0
        %897 = vmatpush.bf16.msra.mxu0 0
        %898 = vmatpush.bf16.msra.mxu0 0
        %899 = vmatpush.bf16.msra.mxu0 0
        %900 = vmatpush.bf16.msra.mxu0 0
        %901 = vmatpush.bf16.msra.mxu0 0
        %902 = vmatpush.bf16.msra.mxu0 0
        %903 = vmatpush.bf16.msra.mxu0 0
        %904 = vmatpush.bf16.msra.mxu0 %v524
        %905 = vmatmul.bf16.gmra.mxu0 %v816
        %v906 = vpop.f32.mrf.mxu0
        %v907 = vadd.f32 %v640, %v906
        %v908 = vpop.f32.mrf.mxu0
        %v909 = vadd.f32 %v642, %v908
        %910 = vmatmul.bf16.gmra.mxu0 %v819
        %v911 = vpop.f32.mrf.mxu0
        %v912 = vadd.f32 %v645, %v911
        %v913 = vpop.f32.mrf.mxu0
        %v914 = vadd.f32 %v647, %v913
        %915 = vdwg.mxu0
        %916 = vmatpush.bf16.msra.mxu0 0
        %917 = vmatpush.bf16.msra.mxu0 0
        %918 = vmatpush.bf16.msra.mxu0 0
        %919 = vmatpush.bf16.msra.mxu0 0
        %920 = vmatpush.bf16.msra.mxu0 0
        %921 = vmatpush.bf16.msra.mxu0 0
        %922 = vmatpush.bf16.msra.mxu0 0
        %923 = vmatpush.bf16.msra.mxu0 %v525
        %924 = vmatmul.bf16.gmra.mxu0 %v816
        %v925 = vpop.f32.mrf.mxu0
        %v926 = vadd.f32 %v659, %v925
        %v927 = vpop.f32.mrf.mxu0
        %v928 = vadd.f32 %v661, %v927
        %929 = vmatmul.bf16.gmra.mxu0 %v819
        %v930 = vpop.f32.mrf.mxu0
        %v931 = vadd.f32 %v664, %v930
        %v932 = vpop.f32.mrf.mxu0
        %v933 = vadd.f32 %v666, %v932
        %934 = vdwg.mxu0
        %935 = vmatpush.bf16.msra.mxu0 0
        %936 = vmatpush.bf16.msra.mxu0 0
        %937 = vmatpush.bf16.msra.mxu0 0
        %938 = vmatpush.bf16.msra.mxu0 0
        %939 = vmatpush.bf16.msra.mxu0 0
        %940 = vmatpush.bf16.msra.mxu0 0
        %941 = vmatpush.bf16.msra.mxu0 0
        %942 = vmatpush.bf16.msra.mxu0 %v526
        %943 = vmatmul.bf16.gmra.mxu0 %v816
        %v944 = vpop.f32.mrf.mxu0
        %v945 = vadd.f32 %v678, %v944
        %v946 = vpop.f32.mrf.mxu0
        %v947 = vadd.f32 %v680, %v946
        %948 = vmatmul.bf16.gmra.mxu0 %v819
        %v949 = vpop.f32.mrf.mxu0
        %v950 = vadd.f32 %v683, %v949
        %v951 = vpop.f32.mrf.mxu0
        %v952 = vadd.f32 %v685, %v951
        %953 = vdwg.mxu0
        %954 = vmatpush.bf16.msra.mxu0 0
        %955 = vmatpush.bf16.msra.mxu0 0
        %956 = vmatpush.bf16.msra.mxu0 0
        %957 = vmatpush.bf16.msra.mxu0 0
        %958 = vmatpush.bf16.msra.mxu0 0
        %959 = vmatpush.bf16.msra.mxu0 0
        %960 = vmatpush.bf16.msra.mxu0 0
        %961 = vmatpush.bf16.msra.mxu0 %v527
        %962 = vmatmul.bf16.gmra.mxu0 %v816
        %v963 = vpop.f32.mrf.mxu0
        %v964 = vadd.f32 %v697, %v963
        %v965 = vpop.f32.mrf.mxu0
        %v966 = vadd.f32 %v699, %v965
        %967 = vmatmul.bf16.gmra.mxu0 %v819
        %v968 = vpop.f32.mrf.mxu0
        %v969 = vadd.f32 %v702, %v968
        %v970 = vpop.f32.mrf.mxu0
        %v971 = vadd.f32 %v704, %v970
        %972 = vdwg.mxu0
        %973 = vmatpush.bf16.msra.mxu0 0
        %974 = vmatpush.bf16.msra.mxu0 0
        %975 = vmatpush.bf16.msra.mxu0 0
        %976 = vmatpush.bf16.msra.mxu0 0
        %977 = vmatpush.bf16.msra.mxu0 0
        %978 = vmatpush.bf16.msra.mxu0 0
        %979 = vmatpush.bf16.msra.mxu0 0
        %980 = vmatpush.bf16.msra.mxu0 %v528
        %981 = vmatmul.bf16.gmra.mxu0 %v816
        %v982 = vpop.f32.mrf.mxu0
        %v983 = vadd.f32 %v716, %v982
        %v984 = vpop.f32.mrf.mxu0
        %v985 = vadd.f32 %v718, %v984
        %986 = vmatmul.bf16.gmra.mxu0 %v819
        %v987 = vpop.f32.mrf.mxu0
        %v988 = vadd.f32 %v721, %v987
        %v989 = vpop.f32.mrf.mxu0
        %v990 = vadd.f32 %v723, %v989
        %991 = vdwg.mxu0
        %992 = vmatpush.bf16.msra.mxu0 0
        %993 = vmatpush.bf16.msra.mxu0 0
        %994 = vmatpush.bf16.msra.mxu0 0
        %995 = vmatpush.bf16.msra.mxu0 0
        %996 = vmatpush.bf16.msra.mxu0 0
        %997 = vmatpush.bf16.msra.mxu0 0
        %998 = vmatpush.bf16.msra.mxu0 0
        %999 = vmatpush.bf16.msra.mxu0 %v529
        %1000 = vmatmul.bf16.gmra.mxu0 %v816
        %v1001 = vpop.f32.mrf.mxu0
        %v1002 = vadd.f32 %v735, %v1001
        %v1003 = vpop.f32.mrf.mxu0
        %v1004 = vadd.f32 %v737, %v1003
        %1005 = vmatmul.bf16.gmra.mxu0 %v819
        %v1006 = vpop.f32.mrf.mxu0
        %v1007 = vadd.f32 %v740, %v1006
        %v1008 = vpop.f32.mrf.mxu0
        %v1009 = vadd.f32 %v742, %v1008
        %1010 = vdwg.mxu0
        %1011 = vmatpush.bf16.msra.mxu0 0
        %1012 = vmatpush.bf16.msra.mxu0 0
        %1013 = vmatpush.bf16.msra.mxu0 0
        %1014 = vmatpush.bf16.msra.mxu0 0
        %1015 = vmatpush.bf16.msra.mxu0 0
        %1016 = vmatpush.bf16.msra.mxu0 0
        %1017 = vmatpush.bf16.msra.mxu0 0
        %1018 = vmatpush.bf16.msra.mxu0 %v530
        %1019 = vmatmul.bf16.gmra.mxu0 %v816
        %v1020 = vpop.f32.mrf.mxu0
        %v1021 = vadd.f32 %v754, %v1020
        %v1022 = vpop.f32.mrf.mxu0
        %v1023 = vadd.f32 %v756, %v1022
        %1024 = vmatmul.bf16.gmra.mxu0 %v819
        %v1025 = vpop.f32.mrf.mxu0
        %v1026 = vadd.f32 %v759, %v1025
        %v1027 = vpop.f32.mrf.mxu0
        %v1028 = vadd.f32 %v761, %v1027
        %1029 = vdwg.mxu0
        %1030 = vmatpush.bf16.msra.mxu0 0
        %1031 = vmatpush.bf16.msra.mxu0 0
        %1032 = vmatpush.bf16.msra.mxu0 0
        %1033 = vmatpush.bf16.msra.mxu0 0
        %1034 = vmatpush.bf16.msra.mxu0 0
        %1035 = vmatpush.bf16.msra.mxu0 0
        %1036 = vmatpush.bf16.msra.mxu0 0
        %1037 = vmatpush.bf16.msra.mxu0 %v531
        %1038 = vmatmul.bf16.gmra.mxu0 %v816
        %v1039 = vpop.f32.mrf.mxu0
        %v1040 = vadd.f32 %v773, %v1039
        %v1041 = vpop.f32.mrf.mxu0
        %v1042 = vadd.f32 %v775, %v1041
        %1043 = vmatmul.bf16.gmra.mxu0 %v819
        %v1044 = vpop.f32.mrf.mxu0
        %v1045 = vadd.f32 %v778, %v1044
        %v1046 = vpop.f32.mrf.mxu0
        %v1047 = vadd.f32 %v780, %v1046
        %1048 = vdwg.mxu0
        %1049 = vmatpush.bf16.msra.mxu0 0
        %1050 = vmatpush.bf16.msra.mxu0 0
        %1051 = vmatpush.bf16.msra.mxu0 0
        %1052 = vmatpush.bf16.msra.mxu0 0
        %1053 = vmatpush.bf16.msra.mxu0 0
        %1054 = vmatpush.bf16.msra.mxu0 0
        %1055 = vmatpush.bf16.msra.mxu0 0
        %1056 = vmatpush.bf16.msra.mxu0 %v532
        %1057 = vmatmul.bf16.gmra.mxu0 %v816
        %v1058 = vpop.f32.mrf.mxu0
        %v1059 = vadd.f32 %v792, %v1058
        %v1060 = vpop.f32.mrf.mxu0
        %v1061 = vadd.f32 %v794, %v1060
        %1062 = vmatmul.bf16.gmra.mxu0 %v819
        %v1063 = vpop.f32.mrf.mxu0
        %v1064 = vadd.f32 %v797, %v1063
        %v1065 = vpop.f32.mrf.mxu0
        %v1066 = vadd.f32 %v799, %v1065
        %1067 = vdwg.mxu0
        %v1072 = vunpack.c.l.b16 %v463
        %v1073 = vunpack.c.l.b16 %v464
        %v1074 = vunpack.c.l.b16 %v465
        %v1075 = vunpack.c.l.b16 %v466
        %v1076 = vpack.c.b16 %v1073, %v1072
        %v1077 = vpack.c.b16 %v1075, %v1074
        %v1080 = vunpack.c.l.b16 %v446
        %v1081 = vunpack.c.l.b16 %v454
        %v1082 = vpack.c.b16 %v1081, %v1080
        %v1085 = vsel %vm547, %v1076, 0
        %v1088 = vsel %vm547, %v1077, 0
        %1090 = vmatpush.bf16.msra.mxu0 0
        %1091 = vmatpush.bf16.msra.mxu0 0
        %1092 = vmatpush.bf16.msra.mxu0 0
        %1093 = vmatpush.bf16.msra.mxu0 0
        %1094 = vmatpush.bf16.msra.mxu0 0
        %1095 = vmatpush.bf16.msra.mxu0 0
        %1096 = vmatpush.bf16.msra.mxu0 0
        %1097 = vmatpush.bf16.msra.mxu0 %v522
        %1098 = vmatmul.bf16.gmra.mxu0 %v1085
        %v1099 = vpop.f32.mrf.mxu0
        %v1100 = vadd.f32 0.0, %v1099
        %v1101 = vpop.f32.mrf.mxu0
        %v1102 = vadd.f32 0.0, %v1101
        %1103 = vmatmul.bf16.gmra.mxu0 %v1088
        %v1104 = vpop.f32.mrf.mxu0
        %v1105 = vadd.f32 0.0, %v1104
        %v1106 = vpop.f32.mrf.mxu0
        %v1107 = vadd.f32 0.0, %v1106
        %1108 = vdwg.mxu0
        %1109 = vmatpush.bf16.msra.mxu0 0
        %1110 = vmatpush.bf16.msra.mxu0 0
        %1111 = vmatpush.bf16.msra.mxu0 0
        %1112 = vmatpush.bf16.msra.mxu0 0
        %1113 = vmatpush.bf16.msra.mxu0 0
        %1114 = vmatpush.bf16.msra.mxu0 0
        %1115 = vmatpush.bf16.msra.mxu0 0
        %1116 = vmatpush.bf16.msra.mxu0 %v523
        %1117 = vmatmul.bf16.gmra.mxu0 %v1085
        %v1118 = vpop.f32.mrf.mxu0
        %v1119 = vadd.f32 0.0, %v1118
        %v1120 = vpop.f32.mrf.mxu0
        %v1121 = vadd.f32 0.0, %v1120
        %1122 = vmatmul.bf16.gmra.mxu0 %v1088
        %v1123 = vpop.f32.mrf.mxu0
        %v1124 = vadd.f32 0.0, %v1123
        %v1125 = vpop.f32.mrf.mxu0
        %v1126 = vadd.f32 0.0, %v1125
        %1127 = vdwg.mxu0
        %1128 = vmatpush.bf16.msra.mxu0 0
        %1129 = vmatpush.bf16.msra.mxu0 0
        %1130 = vmatpush.bf16.msra.mxu0 0
        %1131 = vmatpush.bf16.msra.mxu0 0
        %1132 = vmatpush.bf16.msra.mxu0 0
        %1133 = vmatpush.bf16.msra.mxu0 0
        %1134 = vmatpush.bf16.msra.mxu0 0
        %1135 = vmatpush.bf16.msra.mxu0 %v524
        %1136 = vmatmul.bf16.gmra.mxu0 %v1085
        %v1137 = vpop.f32.mrf.mxu0
        %v1138 = vadd.f32 0.0, %v1137
        %v1139 = vpop.f32.mrf.mxu0
        %v1140 = vadd.f32 0.0, %v1139
        %1141 = vmatmul.bf16.gmra.mxu0 %v1088
        %v1142 = vpop.f32.mrf.mxu0
        %v1143 = vadd.f32 0.0, %v1142
        %v1144 = vpop.f32.mrf.mxu0
        %v1145 = vadd.f32 0.0, %v1144
        %1146 = vdwg.mxu0
        %1147 = vmatpush.bf16.msra.mxu0 0
        %1148 = vmatpush.bf16.msra.mxu0 0
        %1149 = vmatpush.bf16.msra.mxu0 0
        %1150 = vmatpush.bf16.msra.mxu0 0
        %1151 = vmatpush.bf16.msra.mxu0 0
        %1152 = vmatpush.bf16.msra.mxu0 0
        %1153 = vmatpush.bf16.msra.mxu0 0
        %1154 = vmatpush.bf16.msra.mxu0 %v525
        %1155 = vmatmul.bf16.gmra.mxu0 %v1085
        %v1156 = vpop.f32.mrf.mxu0
        %v1157 = vadd.f32 0.0, %v1156
        %v1158 = vpop.f32.mrf.mxu0
        %v1159 = vadd.f32 0.0, %v1158
        %1160 = vmatmul.bf16.gmra.mxu0 %v1088
        %v1161 = vpop.f32.mrf.mxu0
        %v1162 = vadd.f32 0.0, %v1161
        %v1163 = vpop.f32.mrf.mxu0
        %v1164 = vadd.f32 0.0, %v1163
        %1165 = vdwg.mxu0
        %1166 = vmatpush.bf16.msra.mxu0 0
        %1167 = vmatpush.bf16.msra.mxu0 0
        %1168 = vmatpush.bf16.msra.mxu0 0
        %1169 = vmatpush.bf16.msra.mxu0 0
        %1170 = vmatpush.bf16.msra.mxu0 0
        %1171 = vmatpush.bf16.msra.mxu0 0
        %1172 = vmatpush.bf16.msra.mxu0 0
        %1173 = vmatpush.bf16.msra.mxu0 %v526
        %1174 = vmatmul.bf16.gmra.mxu0 %v1085
        %v1175 = vpop.f32.mrf.mxu0
        %v1176 = vadd.f32 0.0, %v1175
        %v1177 = vpop.f32.mrf.mxu0
        %v1178 = vadd.f32 0.0, %v1177
        %1179 = vmatmul.bf16.gmra.mxu0 %v1088
        %v1180 = vpop.f32.mrf.mxu0
        %v1181 = vadd.f32 0.0, %v1180
        %v1182 = vpop.f32.mrf.mxu0
        %v1183 = vadd.f32 0.0, %v1182
        %1184 = vdwg.mxu0
        %1185 = vmatpush.bf16.msra.mxu0 0
        %1186 = vmatpush.bf16.msra.mxu0 0
        %1187 = vmatpush.bf16.msra.mxu0 0
        %1188 = vmatpush.bf16.msra.mxu0 0
        %1189 = vmatpush.bf16.msra.mxu0 0
        %1190 = vmatpush.bf16.msra.mxu0 0
        %1191 = vmatpush.bf16.msra.mxu0 0
        %1192 = vmatpush.bf16.msra.mxu0 %v527
        %1193 = vmatmul.bf16.gmra.mxu0 %v1085
        %v1194 = vpop.f32.mrf.mxu0
        %v1195 = vadd.f32 0.0, %v1194
        %v1196 = vpop.f32.mrf.mxu0
        %v1197 = vadd.f32 0.0, %v1196
        %1198 = vmatmul.bf16.gmra.mxu0 %v1088
        %v1199 = vpop.f32.mrf.mxu0
        %v1200 = vadd.f32 0.0, %v1199
        %v1201 = vpop.f32.mrf.mxu0
        %v1202 = vadd.f32 0.0, %v1201
        %1203 = vdwg.mxu0
        %1204 = vmatpush.bf16.msra.mxu0 0
        %1205 = vmatpush.bf16.msra.mxu0 0
        %1206 = vmatpush.bf16.msra.mxu0 0
        %1207 = vmatpush.bf16.msra.mxu0 0
        %1208 = vmatpush.bf16.msra.mxu0 0
        %1209 = vmatpush.bf16.msra.mxu0 0
        %1210 = vmatpush.bf16.msra.mxu0 0
        %1211 = vmatpush.bf16.msra.mxu0 %v528
        %1212 = vmatmul.bf16.gmra.mxu0 %v1085
        %v1213 = vpop.f32.mrf.mxu0
        %v1214 = vadd.f32 0.0, %v1213
        %v1215 = vpop.f32.mrf.mxu0
        %v1216 = vadd.f32 0.0, %v1215
        %1217 = vmatmul.bf16.gmra.mxu0 %v1088
        %v1218 = vpop.f32.mrf.mxu0
        %v1219 = vadd.f32 0.0, %v1218
        %v1220 = vpop.f32.mrf.mxu0
        %v1221 = vadd.f32 0.0, %v1220
        %1222 = vdwg.mxu0
        %1223 = vmatpush.bf16.msra.mxu0 0
        %1224 = vmatpush.bf16.msra.mxu0 0
        %1225 = vmatpush.bf16.msra.mxu0 0
        %1226 = vmatpush.bf16.msra.mxu0 0
        %1227 = vmatpush.bf16.msra.mxu0 0
        %1228 = vmatpush.bf16.msra.mxu0 0
        %1229 = vmatpush.bf16.msra.mxu0 0
        %1230 = vmatpush.bf16.msra.mxu0 %v529
        %1231 = vmatmul.bf16.gmra.mxu0 %v1085
        %v1232 = vpop.f32.mrf.mxu0
        %v1233 = vadd.f32 0.0, %v1232
        %v1234 = vpop.f32.mrf.mxu0
        %v1235 = vadd.f32 0.0, %v1234
        %1236 = vmatmul.bf16.gmra.mxu0 %v1088
        %v1237 = vpop.f32.mrf.mxu0
        %v1238 = vadd.f32 0.0, %v1237
        %v1239 = vpop.f32.mrf.mxu0
        %v1240 = vadd.f32 0.0, %v1239
        %1241 = vdwg.mxu0
        %1242 = vmatpush.bf16.msra.mxu0 0
        %1243 = vmatpush.bf16.msra.mxu0 0
        %1244 = vmatpush.bf16.msra.mxu0 0
        %1245 = vmatpush.bf16.msra.mxu0 0
        %1246 = vmatpush.bf16.msra.mxu0 0
        %1247 = vmatpush.bf16.msra.mxu0 0
        %1248 = vmatpush.bf16.msra.mxu0 0
        %1249 = vmatpush.bf16.msra.mxu0 %v530
        %1250 = vmatmul.bf16.gmra.mxu0 %v1085
        %v1251 = vpop.f32.mrf.mxu0
        %v1252 = vadd.f32 0.0, %v1251
        %v1253 = vpop.f32.mrf.mxu0
        %v1254 = vadd.f32 0.0, %v1253
        %1255 = vmatmul.bf16.gmra.mxu0 %v1088
        %v1256 = vpop.f32.mrf.mxu0
        %v1257 = vadd.f32 0.0, %v1256
        %v1258 = vpop.f32.mrf.mxu0
        %v1259 = vadd.f32 0.0, %v1258
        %1260 = vdwg.mxu0
        %1261 = vmatpush.bf16.msra.mxu0 0
        %1262 = vmatpush.bf16.msra.mxu0 0
        %1263 = vmatpush.bf16.msra.mxu0 0
        %1264 = vmatpush.bf16.msra.mxu0 0
        %1265 = vmatpush.bf16.msra.mxu0 0
        %1266 = vmatpush.bf16.msra.mxu0 0
        %1267 = vmatpush.bf16.msra.mxu0 0
        %1268 = vmatpush.bf16.msra.mxu0 %v531
        %1269 = vmatmul.bf16.gmra.mxu0 %v1085
        %v1270 = vpop.f32.mrf.mxu0
        %v1271 = vadd.f32 0.0, %v1270
        %v1272 = vpop.f32.mrf.mxu0
        %v1273 = vadd.f32 0.0, %v1272
        %1274 = vmatmul.bf16.gmra.mxu0 %v1088
        %v1275 = vpop.f32.mrf.mxu0
        %v1276 = vadd.f32 0.0, %v1275
        %v1277 = vpop.f32.mrf.mxu0
        %v1278 = vadd.f32 0.0, %v1277
        %1279 = vdwg.mxu0
        %1280 = vmatpush.bf16.msra.mxu0 0
        %1281 = vmatpush.bf16.msra.mxu0 0
        %1282 = vmatpush.bf16.msra.mxu0 0
        %1283 = vmatpush.bf16.msra.mxu0 0
        %1284 = vmatpush.bf16.msra.mxu0 0
        %1285 = vmatpush.bf16.msra.mxu0 0
        %1286 = vmatpush.bf16.msra.mxu0 0
        %1287 = vmatpush.bf16.msra.mxu0 %v532
        %1288 = vmatmul.bf16.gmra.mxu0 %v1085
        %v1289 = vpop.f32.mrf.mxu0
        %v1290 = vadd.f32 0.0, %v1289
        %v1291 = vpop.f32.mrf.mxu0
        %v1292 = vadd.f32 0.0, %v1291
        %1293 = vmatmul.bf16.gmra.mxu0 %v1088
        %v1294 = vpop.f32.mrf.mxu0
        %v1295 = vadd.f32 0.0, %v1294
        %v1296 = vpop.f32.mrf.mxu0
        %v1297 = vadd.f32 0.0, %v1296
        %1298 = vdwg.mxu0
        %1299 = vmatpush.bf16.msra.mxu0 0
        %1300 = vmatpush.bf16.msra.mxu0 0
        %1301 = vmatpush.bf16.msra.mxu0 0
        %1302 = vmatpush.bf16.msra.mxu0 0
        %1303 = vmatpush.bf16.msra.mxu0 0
        %1304 = vmatpush.bf16.msra.mxu0 0
        %1305 = vmatpush.bf16.msra.mxu0 0
        %1306 = vmatpush.bf16.msra.mxu0 %v533
        %1307 = vmatmul.bf16.gmra.mxu0 %v1085
        %v1308 = vpop.f32.mrf.mxu0
        %v1309 = vadd.f32 0.0, %v1308
        %v1310 = vpop.f32.mrf.mxu0
        %v1311 = vadd.f32 0.0, %v1310
        %1312 = vmatmul.bf16.gmra.mxu0 %v1088
        %v1313 = vpop.f32.mrf.mxu0
        %v1314 = vadd.f32 0.0, %v1313
        %v1315 = vpop.f32.mrf.mxu0
        %v1316 = vadd.f32 0.0, %v1315
        %1317 = vdwg.mxu0
        %1318 = vmatpush.bf16.msra.mxu0 0
        %1319 = vmatpush.bf16.msra.mxu0 0
        %1320 = vmatpush.bf16.msra.mxu0 0
        %1321 = vmatpush.bf16.msra.mxu0 0
        %1322 = vmatpush.bf16.msra.mxu0 0
        %1323 = vmatpush.bf16.msra.mxu0 0
        %1324 = vmatpush.bf16.msra.mxu0 0
        %1325 = vmatpush.bf16.msra.mxu0 %v1082
        %1326 = vmatmul.bf16.gmra.mxu0 %v1085
        %v1327 = vpop.f32.mrf.mxu0
        %v1328 = vadd.f32 0.0, %v1327
        %v1329 = vpop.f32.mrf.mxu0
        %v1330 = vadd.f32 0.0, %v1329
        %1331 = vmatmul.bf16.gmra.mxu0 %v1088
        %v1332 = vpop.f32.mrf.mxu0
        %v1333 = vadd.f32 0.0, %v1332
        %v1334 = vpop.f32.mrf.mxu0
        %v1335 = vadd.f32 0.0, %v1334
        %1336 = vdwg.mxu0
        %v1337 = vadd.f32 %v831, %v1100
        %v1338 = vadd.f32 %v850, %v1119
        %v1339 = vadd.f32 %v869, %v1138
        %v1340 = vadd.f32 %v888, %v1157
        %v1341 = vadd.f32 %v907, %v1176
        %v1342 = vadd.f32 %v926, %v1195
        %v1343 = vadd.f32 %v945, %v1214
        %v1344 = vadd.f32 %v964, %v1233
        %v1345 = vadd.f32 %v983, %v1252
        %v1346 = vadd.f32 %v1002, %v1271
        %v1347 = vadd.f32 %v1021, %v1290
        %v1348 = vadd.f32 %v1040, %v1309
        %v1349 = vadd.f32 %v1059, %v1328
        %v1350 = vadd.f32 %v833, %v1102
        %v1351 = vadd.f32 %v852, %v1121
        %v1352 = vadd.f32 %v871, %v1140
        %v1353 = vadd.f32 %v890, %v1159
        %v1354 = vadd.f32 %v909, %v1178
        %v1355 = vadd.f32 %v928, %v1197
        %v1356 = vadd.f32 %v947, %v1216
        %v1357 = vadd.f32 %v966, %v1235
        %v1358 = vadd.f32 %v985, %v1254
        %v1359 = vadd.f32 %v1004, %v1273
        %v1360 = vadd.f32 %v1023, %v1292
        %v1361 = vadd.f32 %v1042, %v1311
        %v1362 = vadd.f32 %v1061, %v1330
        %v1363 = vadd.f32 %v836, %v1105
        %v1364 = vadd.f32 %v855, %v1124
        %v1365 = vadd.f32 %v874, %v1143
        %v1366 = vadd.f32 %v893, %v1162
        %v1367 = vadd.f32 %v912, %v1181
        %v1368 = vadd.f32 %v931, %v1200
        %v1369 = vadd.f32 %v950, %v1219
        %v1370 = vadd.f32 %v969, %v1238
        %v1371 = vadd.f32 %v988, %v1257
        %v1372 = vadd.f32 %v1007, %v1276
        %v1373 = vadd.f32 %v1026, %v1295
        %v1374 = vadd.f32 %v1045, %v1314
        %v1375 = vadd.f32 %v1064, %v1333
        %v1376 = vadd.f32 %v838, %v1107
        %v1377 = vadd.f32 %v857, %v1126
        %v1378 = vadd.f32 %v876, %v1145
        %v1379 = vadd.f32 %v895, %v1164
        %v1380 = vadd.f32 %v914, %v1183
        %v1381 = vadd.f32 %v933, %v1202
        %v1382 = vadd.f32 %v952, %v1221
        %v1383 = vadd.f32 %v971, %v1240
        %v1384 = vadd.f32 %v990, %v1259
        %v1385 = vadd.f32 %v1009, %v1278
        %v1386 = vadd.f32 %v1028, %v1297
        %v1387 = vadd.f32 %v1047, %v1316
        %v1388 = vadd.f32 %v1066, %v1335
        %1390 = vset.pattern.permute.xlu0 0
        %1391 = vperm.xlu0 %1390, %v467
        %v1392 = vpop.permute.xlu0 %1391
        %1395 = vset.pattern.permute.xlu0 0
        %1396 = vperm.xlu0 %1395, %v468
        %v1397 = vpop.permute.xlu0 %1396
        %1400 = vset.pattern.permute.xlu0 0
        %1401 = vperm.xlu0 %1400, %v469
        %v1402 = vpop.permute.xlu0 %1401
        %1405 = vset.pattern.permute.xlu0 0
        %1406 = vperm.xlu0 %1405, %v470
        %v1407 = vpop.permute.xlu0 %1406
        %v1409 = vadd.f32 %v1337, %v1392
        %v1410 = vadd.f32 %v1338, %v1392
        %v1411 = vadd.f32 %v1339, %v1392
        %v1412 = vadd.f32 %v1340, %v1392
        %v1413 = vadd.f32 %v1341, %v1392
        %v1414 = vadd.f32 %v1342, %v1392
        %v1415 = vadd.f32 %v1343, %v1392
        %v1416 = vadd.f32 %v1344, %v1392
        %v1417 = vadd.f32 %v1345, %v1392
        %v1418 = vadd.f32 %v1346, %v1392
        %v1419 = vadd.f32 %v1347, %v1392
        %v1420 = vadd.f32 %v1348, %v1392
        %v1421 = vadd.f32 %v1349, %v1392
        %v1422 = vadd.f32 %v1350, %v1397
        %v1423 = vadd.f32 %v1351, %v1397
        %v1424 = vadd.f32 %v1352, %v1397
        %v1425 = vadd.f32 %v1353, %v1397
        %v1426 = vadd.f32 %v1354, %v1397
        %v1427 = vadd.f32 %v1355, %v1397
        %v1428 = vadd.f32 %v1356, %v1397
        %v1429 = vadd.f32 %v1357, %v1397
        %v1430 = vadd.f32 %v1358, %v1397
        %v1431 = vadd.f32 %v1359, %v1397
        %v1432 = vadd.f32 %v1360, %v1397
        %v1433 = vadd.f32 %v1361, %v1397
        %v1434 = vadd.f32 %v1362, %v1397
        %v1435 = vadd.f32 %v1363, %v1402
        %v1436 = vadd.f32 %v1364, %v1402
        %v1437 = vadd.f32 %v1365, %v1402
        %v1438 = vadd.f32 %v1366, %v1402
        %v1439 = vadd.f32 %v1367, %v1402
        %v1440 = vadd.f32 %v1368, %v1402
        %v1441 = vadd.f32 %v1369, %v1402
        %v1442 = vadd.f32 %v1370, %v1402
        %v1443 = vadd.f32 %v1371, %v1402
        %v1444 = vadd.f32 %v1372, %v1402
        %v1445 = vadd.f32 %v1373, %v1402
        %v1446 = vadd.f32 %v1374, %v1402
        %v1447 = vadd.f32 %v1375, %v1402
        %v1448 = vadd.f32 %v1376, %v1407
        %v1449 = vadd.f32 %v1377, %v1407
        %v1450 = vadd.f32 %v1378, %v1407
        %v1451 = vadd.f32 %v1379, %v1407
        %v1452 = vadd.f32 %v1380, %v1407
        %v1453 = vadd.f32 %v1381, %v1407
        %v1454 = vadd.f32 %v1382, %v1407
        %v1455 = vadd.f32 %v1383, %v1407
        %v1456 = vadd.f32 %v1384, %v1407
        %v1457 = vadd.f32 %v1385, %v1407
        %v1458 = vadd.f32 %v1386, %v1407
        %v1459 = vadd.f32 %v1387, %v1407
        %v1460 = vadd.f32 %v1388, %v1407
        %v1461 = vmax.f32 %v1409, 0.0
        %v1462 = vmax.f32 %v1410, 0.0
        %v1463 = vmax.f32 %v1411, 0.0
        %v1464 = vmax.f32 %v1412, 0.0
        %v1465 = vmax.f32 %v1413, 0.0
        %v1466 = vmax.f32 %v1414, 0.0
        %v1467 = vmax.f32 %v1415, 0.0
        %v1468 = vmax.f32 %v1416, 0.0
        %v1469 = vmax.f32 %v1417, 0.0
        %v1470 = vmax.f32 %v1418, 0.0
        %v1471 = vmax.f32 %v1419, 0.0
        %v1472 = vmax.f32 %v1420, 0.0
        %v1473 = vmax.f32 %v1421, 0.0
        %v1474 = vmax.f32 %v1422, 0.0
        %v1475 = vmax.f32 %v1423, 0.0
        %v1476 = vmax.f32 %v1424, 0.0
        %v1477 = vmax.f32 %v1425, 0.0
        %v1478 = vmax.f32 %v1426, 0.0
        %v1479 = vmax.f32 %v1427, 0.0
        %v1480 = vmax.f32 %v1428, 0.0
        %v1481 = vmax.f32 %v1429, 0.0
        %v1482 = vmax.f32 %v1430, 0.0
        %v1483 = vmax.f32 %v1431, 0.0
        %v1484 = vmax.f32 %v1432, 0.0
        %v1485 = vmax.f32 %v1433, 0.0
        %v1486 = vmax.f32 %v1434, 0.0
        %v1487 = vmax.f32 %v1435, 0.0
        %v1488 = vmax.f32 %v1436, 0.0
        %v1489 = vmax.f32 %v1437, 0.0
        %v1490 = vmax.f32 %v1438, 0.0
        %v1491 = vmax.f32 %v1439, 0.0
        %v1492 = vmax.f32 %v1440, 0.0
        %v1493 = vmax.f32 %v1441, 0.0
        %v1494 = vmax.f32 %v1442, 0.0
        %v1495 = vmax.f32 %v1443, 0.0
        %v1496 = vmax.f32 %v1444, 0.0
        %v1497 = vmax.f32 %v1445, 0.0
        %v1498 = vmax.f32 %v1446, 0.0
        %v1499 = vmax.f32 %v1447, 0.0
        %v1500 = vmax.f32 %v1448, 0.0
        %v1501 = vmax.f32 %v1449, 0.0
        %v1502 = vmax.f32 %v1450, 0.0
        %v1503 = vmax.f32 %v1451, 0.0
        %v1504 = vmax.f32 %v1452, 0.0
        %v1505 = vmax.f32 %v1453, 0.0
        %v1506 = vmax.f32 %v1454, 0.0
        %v1507 = vmax.f32 %v1455, 0.0
        %v1508 = vmax.f32 %v1456, 0.0
        %v1509 = vmax.f32 %v1457, 0.0
        %v1510 = vmax.f32 %v1458, 0.0
        %v1511 = vmax.f32 %v1459, 0.0
        %v1512 = vmax.f32 %v1460, 0.0
        %v1513 = vpack.c.bf16 %v1462, %v1461
        %v1514 = vpack.c.bf16 %v1464, %v1463
        %v1515 = vpack.c.bf16 %v1466, %v1465
        %v1516 = vpack.c.bf16 %v1468, %v1467
        %v1517 = vpack.c.bf16 %v1470, %v1469
        %v1518 = vpack.c.bf16 %v1472, %v1471
        %v1519 = vpack.c.bf16 %v1473, %v1473
        %v1520 = vpack.c.bf16 %v1475, %v1474
        %v1521 = vpack.c.bf16 %v1477, %v1476
        %v1522 = vpack.c.bf16 %v1479, %v1478
        %v1523 = vpack.c.bf16 %v1481, %v1480
        %v1524 = vpack.c.bf16 %v1483, %v1482
        %v1525 = vpack.c.bf16 %v1485, %v1484
        %v1526 = vpack.c.bf16 %v1486, %v1486
        %v1527 = vpack.c.bf16 %v1488, %v1487
        %v1528 = vpack.c.bf16 %v1490, %v1489
        %v1529 = vpack.c.bf16 %v1492, %v1491
        %v1530 = vpack.c.bf16 %v1494, %v1493
        %v1531 = vpack.c.bf16 %v1496, %v1495
        %v1532 = vpack.c.bf16 %v1498, %v1497
        %v1533 = vpack.c.bf16 %v1499, %v1499
        %v1534 = vpack.c.bf16 %v1501, %v1500
        %v1535 = vpack.c.bf16 %v1503, %v1502
        %v1536 = vpack.c.bf16 %v1505, %v1504
        %v1537 = vpack.c.bf16 %v1507, %v1506
        %v1538 = vpack.c.bf16 %v1509, %v1508
        %v1539 = vpack.c.bf16 %v1511, %v1510
        %v1540 = vpack.c.bf16 %v1512, %v1512
        %v1541 = vld [vmem:[%s3] sm:$0xf]
        %v1542 = vld [vmem:[%s3 + $0x4] sm:$0xf]
        %v1543 = vld [vmem:[%s3 + $0x8] sm:$0xf]
        %v1544 = vld [vmem:[%s3 + $0xc] sm:$0xf]
        %v1545 = vld [vmem:[%s3 + $0x10] sm:$0xf]
        %v1546 = vld [vmem:[%s3 + $0x14] sm:$0xf]
        %v1547 = vld [vmem:[%s3 + $0x18] sm:$0xf]
        %v1548 = vld [vmem:[%s3 + $0x1c] sm:$0xf]
        %v1549 = vld [vmem:[%s3 + $0x20] sm:$0xf]
        %v1550 = vld [vmem:[%s3 + $0x24] sm:$0xf]
        %v1551 = vld [vmem:[%s3 + $0x28] sm:$0xf]
        %v1552 = vld [vmem:[%s3 + $0x2c] sm:$0xf]
        %v1553 = vld [vmem:[%s4] sm:$0xff]
        %v1554 = vld [vmem:[%s4 + $0x8] sm:$0xff]
        %v1555 = vld [vmem:[%s4 + $0x10] sm:$0xff]
        %v1556 = vld [vmem:[%s4 + $0x18] sm:$0xff]
        %v1561 = vunpack.c.l.b16 %v1545
        %v1562 = vunpack.c.l.b16 %v1546
        %v1563 = vunpack.c.l.b16 %v1547
        %v1564 = vunpack.c.l.b16 %v1548
        %v1565 = vpack.c.b16 %v1562, %v1561
        %v1566 = vpack.c.b16 %v1564, %v1563
        %v1579 = vunpack.c.l.b16 %v1514
        %v1580 = vunpack.c.h.b16 %v1514
        %v1581 = vunpack.c.l.b16 %v1516
        %v1582 = vunpack.c.h.b16 %v1516
        %v1583 = vunpack.c.l.b16 %v1518
        %v1584 = vunpack.c.l.b16 %v1521
        %v1585 = vunpack.c.h.b16 %v1521
        %v1586 = vunpack.c.l.b16 %v1523
        %v1587 = vunpack.c.h.b16 %v1523
        %v1588 = vunpack.c.l.b16 %v1525
        %v1589 = vunpack.c.l.b16 %v1528
        %v1590 = vunpack.c.h.b16 %v1528
        %v1591 = vunpack.c.l.b16 %v1530
        %v1592 = vunpack.c.h.b16 %v1530
        %v1593 = vunpack.c.l.b16 %v1532
        %v1594 = vunpack.c.l.b16 %v1535
        %v1595 = vunpack.c.h.b16 %v1535
        %v1596 = vunpack.c.l.b16 %v1537
        %v1597 = vunpack.c.h.b16 %v1537
        %v1598 = vunpack.c.l.b16 %v1539
        %v1599 = vpack.c.b16 %v1584, %v1579
        %v1600 = vpack.c.b16 %v1585, %v1580
        %v1601 = vpack.c.b16 %v1586, %v1581
        %v1602 = vpack.c.b16 %v1587, %v1582
        %v1603 = vpack.c.b16 %v1588, %v1583
        %v1604 = vpack.c.b16 %v1594, %v1589
        %v1605 = vpack.c.b16 %v1595, %v1590
        %v1606 = vpack.c.b16 %v1596, %v1591
        %v1607 = vpack.c.b16 %v1597, %v1592
        %v1608 = vpack.c.b16 %v1598, %v1593
        %vm1619 = vcmask 261120
        %v1621 = vsel %vm1619, %v1565, 0
        %v1624 = vsel %vm1619, %v1566, 0
        %1626 = vmatpush.bf16.msra.mxu0 0
        %1627 = vmatpush.bf16.msra.mxu0 0
        %1628 = vmatpush.bf16.msra.mxu0 0
        %1629 = vmatpush.bf16.msra.mxu0 0
        %1630 = vmatpush.bf16.msra.mxu0 0
        %1631 = vmatpush.bf16.msra.mxu0 0
        %1632 = vmatpush.bf16.msra.mxu0 %v1604
        %1633 = vmatpush.bf16.msra.mxu0 %v1599
        %1634 = vmatmul.bf16.gmra.mxu0 %v1621
        %v1635 = vpop.f32.mrf.mxu0
        %v1636 = vadd.f32 0.0, %v1635
        %v1637 = vpop.f32.mrf.mxu0
        %v1638 = vadd.f32 0.0, %v1637
        %1639 = vmatmul.bf16.gmra.mxu0 %v1624
        %v1640 = vpop.f32.mrf.mxu0
        %v1641 = vadd.f32 0.0, %v1640
        %v1642 = vpop.f32.mrf.mxu0
        %v1643 = vadd.f32 0.0, %v1642
        %1644 = vdwg.mxu0
        %1645 = vmatpush.bf16.msra.mxu0 0
        %1646 = vmatpush.bf16.msra.mxu0 0
        %1647 = vmatpush.bf16.msra.mxu0 0
        %1648 = vmatpush.bf16.msra.mxu0 0
        %1649 = vmatpush.bf16.msra.mxu0 0
        %1650 = vmatpush.bf16.msra.mxu0 0
        %1651 = vmatpush.bf16.msra.mxu0 %v1605
        %1652 = vmatpush.bf16.msra.mxu0 %v1600
        %1653 = vmatmul.bf16.gmra.mxu0 %v1621
        %v1654 = vpop.f32.mrf.mxu0
        %v1655 = vadd.f32 0.0, %v1654
        %v1656 = vpop.f32.mrf.mxu0
        %v1657 = vadd.f32 0.0, %v1656
        %1658 = vmatmul.bf16.gmra.mxu0 %v1624
        %v1659 = vpop.f32.mrf.mxu0
        %v1660 = vadd.f32 0.0, %v1659
        %v1661 = vpop.f32.mrf.mxu0
        %v1662 = vadd.f32 0.0, %v1661
        %1663 = vdwg.mxu0
        %1664 = vmatpush.bf16.msra.mxu0 0
        %1665 = vmatpush.bf16.msra.mxu0 0
        %1666 = vmatpush.bf16.msra.mxu0 0
        %1667 = vmatpush.bf16.msra.mxu0 0
        %1668 = vmatpush.bf16.msra.mxu0 0
        %1669 = vmatpush.bf16.msra.mxu0 0
        %1670 = vmatpush.bf16.msra.mxu0 %v1606
        %1671 = vmatpush.bf16.msra.mxu0 %v1601
        %1672 = vmatmul.bf16.gmra.mxu0 %v1621
        %v1673 = vpop.f32.mrf.mxu0
        %v1674 = vadd.f32 0.0, %v1673
        %v1675 = vpop.f32.mrf.mxu0
        %v1676 = vadd.f32 0.0, %v1675
        %1677 = vmatmul.bf16.gmra.mxu0 %v1624
        %v1678 = vpop.f32.mrf.mxu0
        %v1679 = vadd.f32 0.0, %v1678
        %v1680 = vpop.f32.mrf.mxu0
        %v1681 = vadd.f32 0.0, %v1680
        %1682 = vdwg.mxu0
        %1683 = vmatpush.bf16.msra.mxu0 0
        %1684 = vmatpush.bf16.msra.mxu0 0
        %1685 = vmatpush.bf16.msra.mxu0 0
        %1686 = vmatpush.bf16.msra.mxu0 0
        %1687 = vmatpush.bf16.msra.mxu0 0
        %1688 = vmatpush.bf16.msra.mxu0 0
        %1689 = vmatpush.bf16.msra.mxu0 %v1607
        %1690 = vmatpush.bf16.msra.mxu0 %v1602
        %1691 = vmatmul.bf16.gmra.mxu0 %v1621
        %v1692 = vpop.f32.mrf.mxu0
        %v1693 = vadd.f32 0.0, %v1692
        %v1694 = vpop.f32.mrf.mxu0
        %v1695 = vadd.f32 0.0, %v1694
        %1696 = vmatmul.bf16.gmra.mxu0 %v1624
        %v1697 = vpop.f32.mrf.mxu0
        %v1698 = vadd.f32 0.0, %v1697
        %v1699 = vpop.f32.mrf.mxu0
        %v1700 = vadd.f32 0.0, %v1699
        %1701 = vdwg.mxu0
        %1702 = vmatpush.bf16.msra.mxu0 0
        %1703 = vmatpush.bf16.msra.mxu0 0
        %1704 = vmatpush.bf16.msra.mxu0 0
        %1705 = vmatpush.bf16.msra.mxu0 0
        %1706 = vmatpush.bf16.msra.mxu0 0
        %1707 = vmatpush.bf16.msra.mxu0 0
        %1708 = vmatpush.bf16.msra.mxu0 %v1608
        %1709 = vmatpush.bf16.msra.mxu0 %v1603
        %1710 = vmatmul.bf16.gmra.mxu0 %v1621
        %v1711 = vpop.f32.mrf.mxu0
        %v1712 = vadd.f32 0.0, %v1711
        %v1713 = vpop.f32.mrf.mxu0
        %v1714 = vadd.f32 0.0, %v1713
        %1715 = vmatmul.bf16.gmra.mxu0 %v1624
        %v1716 = vpop.f32.mrf.mxu0
        %v1717 = vadd.f32 0.0, %v1716
        %v1718 = vpop.f32.mrf.mxu0
        %v1719 = vadd.f32 0.0, %v1718
        %1720 = vdwg.mxu0
        %v1725 = vunpack.c.l.b16 %v1541
        %v1726 = vunpack.c.l.b16 %v1542
        %v1727 = vunpack.c.l.b16 %v1543
        %v1728 = vunpack.c.l.b16 %v1544
        %v1729 = vpack.c.b16 %v1726, %v1725
        %v1730 = vpack.c.b16 %v1728, %v1727
        %v1743 = vunpack.c.l.b16 %v1513
        %v1744 = vunpack.c.h.b16 %v1513
        %v1745 = vunpack.c.l.b16 %v1515
        %v1746 = vunpack.c.h.b16 %v1515
        %v1747 = vunpack.c.l.b16 %v1517
        %v1748 = vunpack.c.l.b16 %v1520
        %v1749 = vunpack.c.h.b16 %v1520
        %v1750 = vunpack.c.l.b16 %v1522
        %v1751 = vunpack.c.h.b16 %v1522
        %v1752 = vunpack.c.l.b16 %v1524
        %v1753 = vunpack.c.l.b16 %v1527
        %v1754 = vunpack.c.h.b16 %v1527
        %v1755 = vunpack.c.l.b16 %v1529
        %v1756 = vunpack.c.h.b16 %v1529
        %v1757 = vunpack.c.l.b16 %v1531
        %v1758 = vunpack.c.l.b16 %v1534
        %v1759 = vunpack.c.h.b16 %v1534
        %v1760 = vunpack.c.l.b16 %v1536
        %v1761 = vunpack.c.h.b16 %v1536
        %v1762 = vunpack.c.l.b16 %v1538
        %v1763 = vpack.c.b16 %v1748, %v1743
        %v1764 = vpack.c.b16 %v1749, %v1744
        %v1765 = vpack.c.b16 %v1750, %v1745
        %v1766 = vpack.c.b16 %v1751, %v1746
        %v1767 = vpack.c.b16 %v1752, %v1747
        %v1768 = vpack.c.b16 %v1758, %v1753
        %v1769 = vpack.c.b16 %v1759, %v1754
        %v1770 = vpack.c.b16 %v1760, %v1755
        %v1771 = vpack.c.b16 %v1761, %v1756
        %v1772 = vpack.c.b16 %v1762, %v1757
        %v1784 = vsel %vm1619, %v1729, 0
        %v1787 = vsel %vm1619, %v1730, 0
        %1789 = vmatpush.bf16.msra.mxu0 0
        %1790 = vmatpush.bf16.msra.mxu0 0
        %1791 = vmatpush.bf16.msra.mxu0 0
        %1792 = vmatpush.bf16.msra.mxu0 0
        %1793 = vmatpush.bf16.msra.mxu0 0
        %1794 = vmatpush.bf16.msra.mxu0 0
        %1795 = vmatpush.bf16.msra.mxu0 %v1768
        %1796 = vmatpush.bf16.msra.mxu0 %v1763
        %1797 = vmatmul.bf16.gmra.mxu0 %v1784
        %v1798 = vpop.f32.mrf.mxu0
        %v1799 = vadd.f32 %v1636, %v1798
        %v1800 = vpop.f32.mrf.mxu0
        %v1801 = vadd.f32 %v1638, %v1800
        %1802 = vmatmul.bf16.gmra.mxu0 %v1787
        %v1803 = vpop.f32.mrf.mxu0
        %v1804 = vadd.f32 %v1641, %v1803
        %v1805 = vpop.f32.mrf.mxu0
        %v1806 = vadd.f32 %v1643, %v1805
        %1807 = vdwg.mxu0
        %1808 = vmatpush.bf16.msra.mxu0 0
        %1809 = vmatpush.bf16.msra.mxu0 0
        %1810 = vmatpush.bf16.msra.mxu0 0
        %1811 = vmatpush.bf16.msra.mxu0 0
        %1812 = vmatpush.bf16.msra.mxu0 0
        %1813 = vmatpush.bf16.msra.mxu0 0
        %1814 = vmatpush.bf16.msra.mxu0 %v1769
        %1815 = vmatpush.bf16.msra.mxu0 %v1764
        %1816 = vmatmul.bf16.gmra.mxu0 %v1784
        %v1817 = vpop.f32.mrf.mxu0
        %v1818 = vadd.f32 %v1655, %v1817
        %v1819 = vpop.f32.mrf.mxu0
        %v1820 = vadd.f32 %v1657, %v1819
        %1821 = vmatmul.bf16.gmra.mxu0 %v1787
        %v1822 = vpop.f32.mrf.mxu0
        %v1823 = vadd.f32 %v1660, %v1822
        %v1824 = vpop.f32.mrf.mxu0
        %v1825 = vadd.f32 %v1662, %v1824
        %1826 = vdwg.mxu0
        %1827 = vmatpush.bf16.msra.mxu0 0
        %1828 = vmatpush.bf16.msra.mxu0 0
        %1829 = vmatpush.bf16.msra.mxu0 0
        %1830 = vmatpush.bf16.msra.mxu0 0
        %1831 = vmatpush.bf16.msra.mxu0 0
        %1832 = vmatpush.bf16.msra.mxu0 0
        %1833 = vmatpush.bf16.msra.mxu0 %v1770
        %1834 = vmatpush.bf16.msra.mxu0 %v1765
        %1835 = vmatmul.bf16.gmra.mxu0 %v1784
        %v1836 = vpop.f32.mrf.mxu0
        %v1837 = vadd.f32 %v1674, %v1836
        %v1838 = vpop.f32.mrf.mxu0
        %v1839 = vadd.f32 %v1676, %v1838
        %1840 = vmatmul.bf16.gmra.mxu0 %v1787
        %v1841 = vpop.f32.mrf.mxu0
        %v1842 = vadd.f32 %v1679, %v1841
        %v1843 = vpop.f32.mrf.mxu0
        %v1844 = vadd.f32 %v1681, %v1843
        %1845 = vdwg.mxu0
        %1846 = vmatpush.bf16.msra.mxu0 0
        %1847 = vmatpush.bf16.msra.mxu0 0
        %1848 = vmatpush.bf16.msra.mxu0 0
        %1849 = vmatpush.bf16.msra.mxu0 0
        %1850 = vmatpush.bf16.msra.mxu0 0
        %1851 = vmatpush.bf16.msra.mxu0 0
        %1852 = vmatpush.bf16.msra.mxu0 %v1771
        %1853 = vmatpush.bf16.msra.mxu0 %v1766
        %1854 = vmatmul.bf16.gmra.mxu0 %v1784
        %v1855 = vpop.f32.mrf.mxu0
        %v1856 = vadd.f32 %v1693, %v1855
        %v1857 = vpop.f32.mrf.mxu0
        %v1858 = vadd.f32 %v1695, %v1857
        %1859 = vmatmul.bf16.gmra.mxu0 %v1787
        %v1860 = vpop.f32.mrf.mxu0
        %v1861 = vadd.f32 %v1698, %v1860
        %v1862 = vpop.f32.mrf.mxu0
        %v1863 = vadd.f32 %v1700, %v1862
        %1864 = vdwg.mxu0
        %1865 = vmatpush.bf16.msra.mxu0 0
        %1866 = vmatpush.bf16.msra.mxu0 0
        %1867 = vmatpush.bf16.msra.mxu0 0
        %1868 = vmatpush.bf16.msra.mxu0 0
        %1869 = vmatpush.bf16.msra.mxu0 0
        %1870 = vmatpush.bf16.msra.mxu0 0
        %1871 = vmatpush.bf16.msra.mxu0 %v1772
        %1872 = vmatpush.bf16.msra.mxu0 %v1767
        %1873 = vmatmul.bf16.gmra.mxu0 %v1784
        %v1874 = vpop.f32.mrf.mxu0
        %v1875 = vadd.f32 %v1712, %v1874
        %v1876 = vpop.f32.mrf.mxu0
        %v1877 = vadd.f32 %v1714, %v1876
        %1878 = vmatmul.bf16.gmra.mxu0 %v1787
        %v1879 = vpop.f32.mrf.mxu0
        %v1880 = vadd.f32 %v1717, %v1879
        %v1881 = vpop.f32.mrf.mxu0
        %v1882 = vadd.f32 %v1719, %v1881
        %1883 = vdwg.mxu0
        %v1888 = vunpack.c.l.b16 %v1549
        %v1889 = vunpack.c.l.b16 %v1550
        %v1890 = vunpack.c.l.b16 %v1551
        %v1891 = vunpack.c.l.b16 %v1552
        %v1892 = vpack.c.b16 %v1889, %v1888
        %v1893 = vpack.c.b16 %v1891, %v1890
        %v1898 = vunpack.c.h.b16 %v1517
        %v1899 = vunpack.c.l.b16 %v1519
        %v1900 = vunpack.c.h.b16 %v1524
        %v1901 = vunpack.c.l.b16 %v1526
        %v1902 = vunpack.c.h.b16 %v1531
        %v1903 = vunpack.c.l.b16 %v1533
        %v1904 = vunpack.c.h.b16 %v1538
        %v1905 = vunpack.c.l.b16 %v1540
        %v1906 = vpack.c.b16 %v1900, %v1898
        %v1907 = vpack.c.b16 %v1901, %v1899
        %v1908 = vpack.c.b16 %v1904, %v1902
        %v1909 = vpack.c.b16 %v1905, %v1903
        %v1915 = vsel %vm1619, %v1892, 0
        %v1918 = vsel %vm1619, %v1893, 0
        %1920 = vmatpush.bf16.msra.mxu0 0
        %1921 = vmatpush.bf16.msra.mxu0 0
        %1922 = vmatpush.bf16.msra.mxu0 0
        %1923 = vmatpush.bf16.msra.mxu0 0
        %1924 = vmatpush.bf16.msra.mxu0 0
        %1925 = vmatpush.bf16.msra.mxu0 0
        %1926 = vmatpush.bf16.msra.mxu0 %v1770
        %1927 = vmatpush.bf16.msra.mxu0 %v1765
        %1928 = vmatmul.bf16.gmra.mxu0 %v1915
        %v1929 = vpop.f32.mrf.mxu0
        %v1930 = vadd.f32 0.0, %v1929
        %v1931 = vpop.f32.mrf.mxu0
        %v1932 = vadd.f32 0.0, %v1931
        %1933 = vmatmul.bf16.gmra.mxu0 %v1918
        %v1934 = vpop.f32.mrf.mxu0
        %v1935 = vadd.f32 0.0, %v1934
        %v1936 = vpop.f32.mrf.mxu0
        %v1937 = vadd.f32 0.0, %v1936
        %1938 = vdwg.mxu0
        %1939 = vmatpush.bf16.msra.mxu0 0
        %1940 = vmatpush.bf16.msra.mxu0 0
        %1941 = vmatpush.bf16.msra.mxu0 0
        %1942 = vmatpush.bf16.msra.mxu0 0
        %1943 = vmatpush.bf16.msra.mxu0 0
        %1944 = vmatpush.bf16.msra.mxu0 0
        %1945 = vmatpush.bf16.msra.mxu0 %v1771
        %1946 = vmatpush.bf16.msra.mxu0 %v1766
        %1947 = vmatmul.bf16.gmra.mxu0 %v1915
        %v1948 = vpop.f32.mrf.mxu0
        %v1949 = vadd.f32 0.0, %v1948
        %v1950 = vpop.f32.mrf.mxu0
        %v1951 = vadd.f32 0.0, %v1950
        %1952 = vmatmul.bf16.gmra.mxu0 %v1918
        %v1953 = vpop.f32.mrf.mxu0
        %v1954 = vadd.f32 0.0, %v1953
        %v1955 = vpop.f32.mrf.mxu0
        %v1956 = vadd.f32 0.0, %v1955
        %1957 = vdwg.mxu0
        %1958 = vmatpush.bf16.msra.mxu0 0
        %1959 = vmatpush.bf16.msra.mxu0 0
        %1960 = vmatpush.bf16.msra.mxu0 0
        %1961 = vmatpush.bf16.msra.mxu0 0
        %1962 = vmatpush.bf16.msra.mxu0 0
        %1963 = vmatpush.bf16.msra.mxu0 0
        %1964 = vmatpush.bf16.msra.mxu0 %v1772
        %1965 = vmatpush.bf16.msra.mxu0 %v1767
        %1966 = vmatmul.bf16.gmra.mxu0 %v1915
        %v1967 = vpop.f32.mrf.mxu0
        %v1968 = vadd.f32 0.0, %v1967
        %v1969 = vpop.f32.mrf.mxu0
        %v1970 = vadd.f32 0.0, %v1969
        %1971 = vmatmul.bf16.gmra.mxu0 %v1918
        %v1972 = vpop.f32.mrf.mxu0
        %v1973 = vadd.f32 0.0, %v1972
        %v1974 = vpop.f32.mrf.mxu0
        %v1975 = vadd.f32 0.0, %v1974
        %1976 = vdwg.mxu0
        %1977 = vmatpush.bf16.msra.mxu0 0
        %1978 = vmatpush.bf16.msra.mxu0 0
        %1979 = vmatpush.bf16.msra.mxu0 0
        %1980 = vmatpush.bf16.msra.mxu0 0
        %1981 = vmatpush.bf16.msra.mxu0 0
        %1982 = vmatpush.bf16.msra.mxu0 0
        %1983 = vmatpush.bf16.msra.mxu0 %v1908
        %1984 = vmatpush.bf16.msra.mxu0 %v1906
        %1985 = vmatmul.bf16.gmra.mxu0 %v1915
        %v1986 = vpop.f32.mrf.mxu0
        %v1987 = vadd.f32 0.0, %v1986
        %v1988 = vpop.f32.mrf.mxu0
        %v1989 = vadd.f32 0.0, %v1988
        %1990 = vmatmul.bf16.gmra.mxu0 %v1918
        %v1991 = vpop.f32.mrf.mxu0
        %v1992 = vadd.f32 0.0, %v1991
        %v1993 = vpop.f32.mrf.mxu0
        %v1994 = vadd.f32 0.0, %v1993
        %1995 = vdwg.mxu0
        %1996 = vmatpush.bf16.msra.mxu0 0
        %1997 = vmatpush.bf16.msra.mxu0 0
        %1998 = vmatpush.bf16.msra.mxu0 0
        %1999 = vmatpush.bf16.msra.mxu0 0
        %2000 = vmatpush.bf16.msra.mxu0 0
        %2001 = vmatpush.bf16.msra.mxu0 0
        %2002 = vmatpush.bf16.msra.mxu0 %v1909
        %2003 = vmatpush.bf16.msra.mxu0 %v1907
        %2004 = vmatmul.bf16.gmra.mxu0 %v1915
        %v2005 = vpop.f32.mrf.mxu0
        %v2006 = vadd.f32 0.0, %v2005
        %v2007 = vpop.f32.mrf.mxu0
        %v2008 = vadd.f32 0.0, %v2007
        %2009 = vmatmul.bf16.gmra.mxu0 %v1918
        %v2010 = vpop.f32.mrf.mxu0
        %v2011 = vadd.f32 0.0, %v2010
        %v2012 = vpop.f32.mrf.mxu0
        %v2013 = vadd.f32 0.0, %v2012
        %2014 = vdwg.mxu0
        %v2015 = vadd.f32 %v1799, %v1930
        %v2016 = vadd.f32 %v1818, %v1949
        %v2017 = vadd.f32 %v1837, %v1968
        %v2018 = vadd.f32 %v1856, %v1987
        %v2019 = vadd.f32 %v1875, %v2006
        %v2020 = vadd.f32 %v1801, %v1932
        %v2021 = vadd.f32 %v1820, %v1951
        %v2022 = vadd.f32 %v1839, %v1970
        %v2023 = vadd.f32 %v1858, %v1989
        %v2024 = vadd.f32 %v1877, %v2008
        %v2025 = vadd.f32 %v1804, %v1935
        %v2026 = vadd.f32 %v1823, %v1954
        %v2027 = vadd.f32 %v1842, %v1973
        %v2028 = vadd.f32 %v1861, %v1992
        %v2029 = vadd.f32 %v1880, %v2011
        %v2030 = vadd.f32 %v1806, %v1937
        %v2031 = vadd.f32 %v1825, %v1956
        %v2032 = vadd.f32 %v1844, %v1975
        %v2033 = vadd.f32 %v1863, %v1994
        %v2034 = vadd.f32 %v1882, %v2013
        %2036 = vset.pattern.permute.xlu0 0
        %2037 = vperm.xlu0 %2036, %v1553
        %v2038 = vpop.permute.xlu0 %2037
        %2041 = vset.pattern.permute.xlu0 0
        %2042 = vperm.xlu0 %2041, %v1554
        %v2043 = vpop.permute.xlu0 %2042
        %2046 = vset.pattern.permute.xlu0 0
        %2047 = vperm.xlu0 %2046, %v1555
        %v2048 = vpop.permute.xlu0 %2047
        %2051 = vset.pattern.permute.xlu0 0
        %2052 = vperm.xlu0 %2051, %v1556
        %v2053 = vpop.permute.xlu0 %2052
        %v2055 = vadd.f32 %v2015, %v2038
        %v2056 = vadd.f32 %v2016, %v2038
        %v2057 = vadd.f32 %v2017, %v2038
        %v2058 = vadd.f32 %v2018, %v2038
        %v2059 = vadd.f32 %v2019, %v2038
        %v2060 = vadd.f32 %v2020, %v2043
        %v2061 = vadd.f32 %v2021, %v2043
        %v2062 = vadd.f32 %v2022, %v2043
        %v2063 = vadd.f32 %v2023, %v2043
        %v2064 = vadd.f32 %v2024, %v2043
        %v2065 = vadd.f32 %v2025, %v2048
        %v2066 = vadd.f32 %v2026, %v2048
        %v2067 = vadd.f32 %v2027, %v2048
        %v2068 = vadd.f32 %v2028, %v2048
        %v2069 = vadd.f32 %v2029, %v2048
        %v2070 = vadd.f32 %v2030, %v2053
        %v2071 = vadd.f32 %v2031, %v2053
        %v2072 = vadd.f32 %v2032, %v2053
        %v2073 = vadd.f32 %v2033, %v2053
        %v2074 = vadd.f32 %v2034, %v2053
        %v2075 = vmax.f32 %v2055, 0.0
        %v2076 = vmax.f32 %v2056, 0.0
        %v2077 = vmax.f32 %v2057, 0.0
        %v2078 = vmax.f32 %v2058, 0.0
        %v2079 = vmax.f32 %v2059, 0.0
        %v2080 = vmax.f32 %v2060, 0.0
        %v2081 = vmax.f32 %v2061, 0.0
        %v2082 = vmax.f32 %v2062, 0.0
        %v2083 = vmax.f32 %v2063, 0.0
        %v2084 = vmax.f32 %v2064, 0.0
        %v2085 = vmax.f32 %v2065, 0.0
        %v2086 = vmax.f32 %v2066, 0.0
        %v2087 = vmax.f32 %v2067, 0.0
        %v2088 = vmax.f32 %v2068, 0.0
        %v2089 = vmax.f32 %v2069, 0.0
        %v2090 = vmax.f32 %v2070, 0.0
        %v2091 = vmax.f32 %v2071, 0.0
        %v2092 = vmax.f32 %v2072, 0.0
        %v2093 = vmax.f32 %v2073, 0.0
        %v2094 = vmax.f32 %v2074, 0.0
        %v2095 = vpack.c.bf16 %v2076, %v2075
        %v2096 = vpack.c.bf16 %v2078, %v2077
        %v2097 = vpack.c.bf16 %v2079, %v2079
        %v2098 = vpack.c.bf16 %v2081, %v2080
        %v2099 = vpack.c.bf16 %v2083, %v2082
        %v2100 = vpack.c.bf16 %v2084, %v2084
        %v2101 = vpack.c.bf16 %v2086, %v2085
        %v2102 = vpack.c.bf16 %v2088, %v2087
        %v2103 = vpack.c.bf16 %v2089, %v2089
        %v2104 = vpack.c.bf16 %v2091, %v2090
        %v2105 = vpack.c.bf16 %v2093, %v2092
        %v2106 = vpack.c.bf16 %v2094, %v2094
        %v2107 = vld [vmem:[%s5] sm:$0xf]
        %v2108 = vld [vmem:[%s5 + $0x4] sm:$0xf]
        %v2109 = vld [vmem:[%s5 + $0x8] sm:$0xf]
        %v2110 = vld [vmem:[%s5 + $0xc] sm:$0xf]
        %v2111 = vld [vmem:[%s5 + $0x10] sm:$0xf]
        %v2112 = vld [vmem:[%s5 + $0x14] sm:$0xf]
        %v2113 = vld [vmem:[%s5 + $0x18] sm:$0xf]
        %v2114 = vld [vmem:[%s5 + $0x1c] sm:$0xf]
        %v2115 = vld [vmem:[%s5 + $0x20] sm:$0xf]
        %v2116 = vld [vmem:[%s5 + $0x24] sm:$0xf]
        %v2117 = vld [vmem:[%s5 + $0x28] sm:$0xf]
        %v2118 = vld [vmem:[%s5 + $0x2c] sm:$0xf]
        %v2119 = vld [vmem:[%s6] sm:$0xff]
        %v2120 = vld [vmem:[%s6 + $0x8] sm:$0xff]
        %v2121 = vld [vmem:[%s6 + $0x10] sm:$0xff]
        %v2122 = vld [vmem:[%s6 + $0x18] sm:$0xff]
        %v2127 = vunpack.c.l.b16 %v2111
        %v2128 = vunpack.c.l.b16 %v2112
        %v2129 = vunpack.c.l.b16 %v2113
        %v2130 = vunpack.c.l.b16 %v2114
        %v2131 = vpack.c.b16 %v2128, %v2127
        %v2132 = vpack.c.b16 %v2130, %v2129
        %v2137 = vunpack.c.l.b16 %v2096
        %v2138 = vunpack.c.l.b16 %v2099
        %v2139 = vunpack.c.l.b16 %v2102
        %v2140 = vunpack.c.l.b16 %v2105
        %v2141 = vpack.c.b16 %v2138, %v2137
        %v2142 = vpack.c.b16 %v2140, %v2139
        %v2146 = vsel %vm1619, %v2131, 0
        %v2149 = vsel %vm1619, %v2132, 0
        %2151 = vmatpush.bf16.msra.mxu0 0
        %2152 = vmatpush.bf16.msra.mxu0 0
        %2153 = vmatpush.bf16.msra.mxu0 0
        %2154 = vmatpush.bf16.msra.mxu0 0
        %2155 = vmatpush.bf16.msra.mxu0 0
        %2156 = vmatpush.bf16.msra.mxu0 0
        %2157 = vmatpush.bf16.msra.mxu0 %v2142
        %2158 = vmatpush.bf16.msra.mxu0 %v2141
        %2159 = vmatmul.bf16.gmra.mxu0 %v2146
        %v2160 = vpop.f32.mrf.mxu0
        %v2161 = vadd.f32 0.0, %v2160
        %v2162 = vpop.f32.mrf.mxu0
        %v2163 = vadd.f32 0.0, %v2162
        %2164 = vmatmul.bf16.gmra.mxu0 %v2149
        %v2165 = vpop.f32.mrf.mxu0
        %v2166 = vadd.f32 0.0, %v2165
        %v2167 = vpop.f32.mrf.mxu0
        %v2168 = vadd.f32 0.0, %v2167
        %2169 = vdwg.mxu0
        %v2174 = vunpack.c.l.b16 %v2107
        %v2175 = vunpack.c.l.b16 %v2108
        %v2176 = vunpack.c.l.b16 %v2109
        %v2177 = vunpack.c.l.b16 %v2110
        %v2178 = vpack.c.b16 %v2175, %v2174
        %v2179 = vpack.c.b16 %v2177, %v2176
        %v2184 = vunpack.c.l.b16 %v2095
        %v2185 = vunpack.c.l.b16 %v2098
        %v2186 = vunpack.c.l.b16 %v2101
        %v2187 = vunpack.c.l.b16 %v2104
        %v2188 = vpack.c.b16 %v2185, %v2184
        %v2189 = vpack.c.b16 %v2187, %v2186
        %v2193 = vsel %vm1619, %v2178, 0
        %v2196 = vsel %vm1619, %v2179, 0
        %2198 = vmatpush.bf16.msra.mxu0 0
        %2199 = vmatpush.bf16.msra.mxu0 0
        %2200 = vmatpush.bf16.msra.mxu0 0
        %2201 = vmatpush.bf16.msra.mxu0 0
        %2202 = vmatpush.bf16.msra.mxu0 0
        %2203 = vmatpush.bf16.msra.mxu0 0
        %2204 = vmatpush.bf16.msra.mxu0 %v2189
        %2205 = vmatpush.bf16.msra.mxu0 %v2188
        %2206 = vmatmul.bf16.gmra.mxu0 %v2193
        %v2207 = vpop.f32.mrf.mxu0
        %v2208 = vadd.f32 %v2161, %v2207
        %v2209 = vpop.f32.mrf.mxu0
        %v2210 = vadd.f32 %v2163, %v2209
        %2211 = vmatmul.bf16.gmra.mxu0 %v2196
        %v2212 = vpop.f32.mrf.mxu0
        %v2213 = vadd.f32 %v2166, %v2212
        %v2214 = vpop.f32.mrf.mxu0
        %v2215 = vadd.f32 %v2168, %v2214
        %2216 = vdwg.mxu0
        %v2221 = vunpack.c.l.b16 %v2115
        %v2222 = vunpack.c.l.b16 %v2116
        %v2223 = vunpack.c.l.b16 %v2117
        %v2224 = vunpack.c.l.b16 %v2118
        %v2225 = vpack.c.b16 %v2222, %v2221
        %v2226 = vpack.c.b16 %v2224, %v2223
        %v2231 = vunpack.c.l.b16 %v2097
        %v2232 = vunpack.c.l.b16 %v2100
        %v2233 = vunpack.c.l.b16 %v2103
        %v2234 = vunpack.c.l.b16 %v2106
        %v2235 = vpack.c.b16 %v2232, %v2231
        %v2236 = vpack.c.b16 %v2234, %v2233
        %v2240 = vsel %vm1619, %v2225, 0
        %v2243 = vsel %vm1619, %v2226, 0
        %2245 = vmatpush.bf16.msra.mxu0 0
        %2246 = vmatpush.bf16.msra.mxu0 0
        %2247 = vmatpush.bf16.msra.mxu0 0
        %2248 = vmatpush.bf16.msra.mxu0 0
        %2249 = vmatpush.bf16.msra.mxu0 0
        %2250 = vmatpush.bf16.msra.mxu0 0
        %2251 = vmatpush.bf16.msra.mxu0 %v2236
        %2252 = vmatpush.bf16.msra.mxu0 %v2235
        %2253 = vmatmul.bf16.gmra.mxu0 %v2240
        %v2254 = vpop.f32.mrf.mxu0
        %v2255 = vadd.f32 0.0, %v2254
        %v2256 = vpop.f32.mrf.mxu0
        %v2257 = vadd.f32 0.0, %v2256
        %2258 = vmatmul.bf16.gmra.mxu0 %v2243
        %v2259 = vpop.f32.mrf.mxu0
        %v2260 = vadd.f32 0.0, %v2259
        %v2261 = vpop.f32.mrf.mxu0
        %v2262 = vadd.f32 0.0, %v2261
        %2263 = vdwg.mxu0
        %v2264 = vadd.f32 %v2208, %v2255
        %v2265 = vadd.f32 %v2210, %v2257
        %v2266 = vadd.f32 %v2213, %v2260
        %v2267 = vadd.f32 %v2215, %v2262
        %2269 = vset.pattern.permute.xlu0 0
        %2270 = vperm.xlu0 %2269, %v2119
        %v2271 = vpop.permute.xlu0 %2270
        %2274 = vset.pattern.permute.xlu0 0
        %2275 = vperm.xlu0 %2274, %v2120
        %v2276 = vpop.permute.xlu0 %2275
        %2279 = vset.pattern.permute.xlu0 0
        %2280 = vperm.xlu0 %2279, %v2121
        %v2281 = vpop.permute.xlu0 %2280
        %2284 = vset.pattern.permute.xlu0 0
        %2285 = vperm.xlu0 %2284, %v2122
        %v2286 = vpop.permute.xlu0 %2285
        %v2288 = vadd.f32 %v2264, %v2271
        %v2289 = vadd.f32 %v2265, %v2276
        %v2290 = vadd.f32 %v2266, %v2281
        %v2291 = vadd.f32 %v2267, %v2286
        %v2292 = vmax.f32 %v2288, 0.0
        %v2293 = vmax.f32 %v2289, 0.0
        %v2294 = vmax.f32 %v2290, 0.0
        %v2295 = vmax.f32 %v2291, 0.0
        %v2296 = vpack.c.bf16 %v2293, %v2292
        %v2297 = vpack.c.bf16 %v2295, %v2294
        %v2298 = vld [vmem:[%s7] sm:$0xf]
        %v2299 = vld [vmem:[%s8] sm:$0xff]
        %2301 = vset.pattern.permute.xlu0 0
        %2302 = vperm.xlu0 %2301, %v2299
        %v2303 = vpop.permute.xlu0 %2302
        %v2306 = vsel %vm1619, %v2298, 0
        %2308 = vmatpush.bf16.msra.mxu0 0
        %2309 = vmatpush.bf16.msra.mxu0 0
        %2310 = vmatpush.bf16.msra.mxu0 0
        %2311 = vmatpush.bf16.msra.mxu0 0
        %2312 = vmatpush.bf16.msra.mxu0 0
        %2313 = vmatpush.bf16.msra.mxu0 0
        %2314 = vmatpush.bf16.msra.mxu0 %v2297
        %2315 = vmatpush.bf16.msra.mxu0 %v2296
        %2316 = vmatmul.bf16.gmra.mxu0 %v2306
        %v2317 = vpop.f32.mrf.mxu0
        %v2318 = vadd.f32 %v2303, %v2317
        %v2319 = vpop.f32.mrf.mxu0
        %2320 = vdwg.mxu0
        %2321 = vst [vmem:[%s323] sm:$0xff] %v2318
        %s2322 = sand.u32 %s225, 1
        %s2323 = scalar_lea.sflag [#allocation3], %s2322
        %s2324 = sand.u32 %s225, 1
        %s2325 = smul.addr %s2324, 8
        %s2326 = scalar_lea.vmem [#allocation2], %s2325
        // Predicated region
        $region57: #{tpu_custom_call.1} parent=55 // pred_check
          %p2327 = pneg %p235
        $region58: #{tpu_custom_call.1} parent=55 // pred_check_branch
          %2329 = sbr.rel (%p2327) target = $region60
        $region59: #{tpu_custom_call.1} parent=55 // pred_region
          %2331 = vsyncadd %s2323, 0
          %s2332 = smul.addr %s23, 8
          %s2333 = scalar_lea.hbm %s9, %s2332
          %s2335 = sshll.u32 %s2326, 4
          %s2336 = int_to_ptr.vmem [resolvable:$true] %s2335
          %s2337 = sshll.u32 %s2333, 4
          %s2338 = int_to_ptr.hbm [resolvable:$true] %s2337
          %2340 = dma.vmem_to_hbm [thread:$0]  %s2336, 128, %s2338, %s2323
        $region60: #{tpu_custom_call.1} parent=55 // pred_fallthru
          _
      $region56: #{tpu_custom_call.1} parent=5 // pred_fallthru
        _
      %p2341 = scmp.le.s32.totalorder 2, %s18
      // Predicated region
      $region61: #{tpu_custom_call.1} parent=5 // pred_check
        %p2342 = pneg %p2341
      $region62: #{tpu_custom_call.1} parent=5 // pred_check_branch
        %2344 = sbr.rel (%p2342) target = $region64
      $region63: #{tpu_custom_call.1} parent=5 // pred_region
        %s2345 = ssub.s32 %s18, 2
        // Predicated region
        $region65: #{tpu_custom_call.1} parent=63 // pred_check
          %p2346 = pneg %p241
        $region66: #{tpu_custom_call.1} parent=63 // pred_check_branch
          %2348 = sbr.rel (%p2346) target = $region68
        $region67: #{tpu_custom_call.1} parent=63 // pred_region
          %s2349 = sand.u32 %s226, 1
          %s2350 = scalar_lea.sflag [#allocation3], %s2349
          %s2351 = sand.u32 %s226, 1
          %s2352 = smul.addr %s2351, 8
          %s2353 = scalar_lea.vmem [#allocation2], %s2352
          %2355 = dma.done %s2350, 128
        $region68: #{tpu_custom_call.1} parent=63 // pred_fallthru
          _
      $region64: #{tpu_custom_call.1} parent=5 // pred_fallthru
        _
    $region6: #{tpu_custom_call.1} parent=1 // loop_footer
      %s22 = sadd.s32 1, %s18
    $region7: #{tpu_custom_call.1} parent=1 // loop_footer_branch
      %17 = sbr.rel target = $region3
    $region8: #{tpu_custom_call.1} parent=1 // loop_exit
      _
    %2356 = vsyncpa [#allocation3], 1
    %s2357 = scalar_lea.sflag [#allocation3], 1
    %2358 = vsyncpa %s2357, 1

</llo_original>
